<compile_context>
chip_gen: v6e
topology: v6e:2x2x1
jax: 0.10.0
libtpu: 0.0.40
codegen_flags: <defaults>
</compile_context>

<pallas_src>
import functools

import jax
import jax.numpy as jnp
from jax import lax
from jax.experimental import pallas as pl
from jax.experimental.pallas import tpu as pltpu

LANE = 128


def _round_up(x, m=LANE):
    return ((x + m - 1) // m) * m


def _const_spec(shape):
    """BlockSpec for an operand that is identical for every grid step."""
    index_map = lambda n, i: (0,) * len(shape)
    try:
        # Constant index_map -> double buffering buys nothing; single-buffer it.
        return pl.BlockSpec(shape, index_map, pipeline_mode=pl.Buffered(1))
    except Exception:
        # Older JAX without pipeline_mode / pl.Buffered: plain spec.
        return pl.BlockSpec(shape, index_map)


def _inverted_residual_kernel(x_ref, w1_ref, b1_ref, wdw_ref, bdw_ref,
                              w3_ref, b3_ref, o_ref, *, stride, tile_h,
                              use_res_connect):
    _, _Hpad, W, Cp = x_ref.shape        # _Hpad = H + 2 (zero halo row top/bottom)
    Chp = w1_ref.shape[1]
    Cop = w3_ref.shape[1]
    TH = tile_h
    Hh = TH + 2                          # rows of the halo window

    i = pl.program_id(1)
    row0 = pl.multiple_of(i * TH, TH)    # stripe start in the row-padded image

    # (TH+2, W, Cp) halo window; the expand conv is recomputed on the 2 halo rows.
    xh = x_ref[0, pl.ds(row0, Hh), :, :]
    x2d = xh.reshape(Hh * W, Cp)

    # ---- 1x1 expand conv (+ folded BN) + ReLU6 : bf16 MXU feed, f32 acc -----
    h = jnp.dot(x2d.astype(jnp.bfloat16), w1_ref[...],
                preferred_element_type=jnp.float32)
    h = jnp.clip(h + b1_ref[...], 0.0, 6.0).reshape(Hh, W, Chp)

    # ---- 3x3 depthwise conv (pad 1) (+ folded BN) + ReLU6 -------------------
    taps = wdw_ref[...]                              # (9, Chp), row = 3*ky + kx
    t = [taps[k:k + 1, :] for k in range(9)]         # hoisted (1, Chp) taps

    if stride == 1:
        w_idx = lax.broadcasted_iota(jnp.int32, (W, Chp), 0)
        lmask = (w_idx > 0).astype(jnp.float32)       # column w-1 exists
        rmask = (w_idx < W - 1).astype(jnp.float32)   # column w+1 exists

        def row_contrib(rows, ky):
            # rows[j] == h at input row (y + ky - 1) for output row y of stripe
            left = pltpu.roll(rows, shift=1, axis=1) * lmask        # col w-1
            right = pltpu.roll(rows, shift=W - 1, axis=1) * rmask   # col w+1
            return left * t[3 * ky] + rows * t[3 * ky + 1] + right * t[3 * ky + 2]

        acc = row_contrib(h[0:TH], 0)
        acc = acc + row_contrib(h[1:TH + 1], 1)
        acc = acc + row_contrib(h[2:TH + 2], 2)
        TH_out, W_out = TH, W
    else:
        # stride 2: evaluate only at even output rows / columns.
        Wo, THo = W // 2, TH // 2
        h2 = h.reshape(Hh, Wo, 2 * Chp)               # deinterleave columns once
        h_ev = h2[:, :, :Chp]                         # columns 0,2,4,... (center)
        h_od = h2[:, :, Chp:]                         # columns 1,3,5,... (right)
        wo_idx = lax.broadcasted_iota(jnp.int32, (Wo, Chp), 0)
        lmask = (wo_idx > 0).astype(jnp.float32)      # column 2c-1 exists

        def pick_rows(a, start):
            # rows start, start+2, ..., start+TH-2 via an aligned reshape
            return a[start:start + TH].reshape(THo, 2, Wo, Chp)[:, 0]

        def row_contrib2(ev, od, ky):
            left = pltpu.roll(od, shift=1, axis=1) * lmask          # col 2c-1
            return left * t[3 * ky] + ev * t[3 * ky + 1] + od * t[3 * ky + 2]

        acc = row_contrib2(pick_rows(h_ev, 0), pick_rows(h_od, 0), 0)
        acc = acc + row_contrib2(pick_rows(h_ev, 1), pick_rows(h_od, 1), 1)
        acc = acc + row_contrib2(pick_rows(h_ev, 2), pick_rows(h_od, 2), 2)
        TH_out, W_out = THo, Wo

    g = jnp.clip(acc.reshape(TH_out * W_out, Chp) + bdw_ref[...], 0.0, 6.0)

    # ---- 1x1 project conv (+ folded BN) : bf16 MXU feed, f32 acc ------------
    y = jnp.dot(g.astype(jnp.bfloat16), w3_ref[...],
                preferred_element_type=jnp.float32)
    y = y + b3_ref[...]

    if use_res_connect:                      # stride == 1 and Cp == Cop
        y = y + xh[1:TH + 1].reshape(TH * W, Cp)

    o_ref[0] = y.reshape(TH_out, W_out, Cop)  # 128-lane-dense store


def _fold_bn(gamma, beta, mean, var, eps=1e-5):
    scale = gamma / jnp.sqrt(var + eps)
    shift = beta - mean * scale
    return scale, shift


class InvertedResidualPallas:
    """Deterministically initialized equivalent of the PyTorch InvertedResidual."""

    def __init__(self, inp, oup, stride, expand_ratio, key, tile_h=8):
        assert stride in (1, 2)
        assert tile_h % 2 == 0               # required by the stride-2 path
        self.inp, self.oup, self.stride = inp, oup, stride
        self.hid = inp * expand_ratio
        self.use_res_connect = (stride == 1 and inp == oup)
        self.tile_h = tile_h

        # lane-padded channel sizes (multiples of 128)
        self.cp = _round_up(inp)
        self.chp = _round_up(self.hid)
        self.cop = _round_up(oup)

        ks = jax.random.split(key, 15)
        w1 = jax.random.normal(ks[0], (self.hid, inp, 1, 1), jnp.float32) * 0.1
        wdw = jax.random.normal(ks[1], (self.hid, 1, 3, 3), jnp.float32) * 0.1
        w3 = jax.random.normal(ks[2], (oup, self.hid, 1, 1), jnp.float32) * 0.1

        def bn(kg, kb, km, kv, c):
            gamma = 1.0 + 0.1 * jax.random.normal(kg, (c,), jnp.float32)
            beta = 0.1 * jax.random.normal(kb, (c,), jnp.float32)
            mean = 0.1 * jax.random.normal(km, (c,), jnp.float32)
            var = jnp.abs(jax.random.normal(kv, (c,), jnp.float32)) + 0.5
            return gamma, beta, mean, var

        bn1 = bn(ks[3], ks[4], ks[5], ks[6], self.hid)
        bn2 = bn(ks[7], ks[8], ks[9], ks[10], self.hid)
        bn3 = bn(ks[11], ks[12], ks[13], ks[14], oup)
        s1, sh1 = _fold_bn(*bn1)
        s2, sh2 = _fold_bn(*bn2)
        s3, sh3 = _fold_bn(*bn3)

        # Fold BN scales into conv weights; zero-pad every channel dim to 128.
        # The 1x1 weights are stored in bf16 (MXU-native feed, f32 accumulation).
        w1f = (w1[:, :, 0, 0] * s1[:, None]).T                      # (Cin, hid)
        self.w1f = jnp.pad(w1f, ((0, self.cp - inp),
                                 (0, self.chp - self.hid))).astype(jnp.bfloat16)
        self.b1 = jnp.pad(sh1[None, :], ((0, 0), (0, self.chp - self.hid)))

        wdwf = (wdw[:, 0, :, :] * s2[:, None, None]).transpose(1, 2, 0)
        wdwf = wdwf.reshape(9, self.hid)                            # (9, hid)
        self.wdwf = jnp.pad(wdwf, ((0, 0), (0, self.chp - self.hid)))
        self.bdw = jnp.pad(sh2[None, :], ((0, 0), (0, self.chp - self.hid)))

        w3f = (w3[:, :, 0, 0] * s3[:, None]).T                      # (hid, oup)
        self.w3f = jnp.pad(w3f, ((0, self.chp - self.hid),
                                 (0, self.cop - oup))).astype(jnp.bfloat16)
        self.b3 = jnp.pad(sh3[None, :], ((0, 0), (0, self.cop - oup)))

        # raw params kept for the pure-JAX reference check
        self.raw = dict(w1=w1, wdw=wdw, w3=w3, bn1=bn1, bn2=bn2, bn3=bn3)

    def __call__(self, x_nhwc, *, return_padded=False):
        N, H, W, Cin = x_nhwc.shape
        s, TH = self.stride, self.tile_h
        assert Cin in (self.inp, self.cp), "expect dense or 128-padded channels"
        assert H % TH == 0, "H must be a multiple of the row tile"
        # TODO(synk): stages with W=14/7 should pad W to 16/8 (or fold batch)
        # before the kernel to keep the (H*W, C) reshapes (8,128)-tile aligned.
        assert W % 8 == 0, "W must be a multiple of 8"
        if s == 2:
            assert H % 2 == 0 and W % 2 == 0
        H_out, W_out = H // s, W // s

        # One zero halo row top/bottom (+ lane-pad channels only if the caller
        # handed us the dense layout).  Chained blocks should pass the padded
        # layout and set return_padded=True to skip the HBM pad/slice round trip.
        x_p = jnp.pad(x_nhwc, ((0, 0), (1, 1), (0, 0), (0, self.cp - Cin)))

        kern = functools.partial(_inverted_residual_kernel, stride=s,
                                 tile_h=TH,
                                 use_res_connect=self.use_res_connect)
        out_p = pl.pallas_call(
            kern,
            out_shape=jax.ShapeDtypeStruct((N, H_out, W_out, self.cop),
                                           jnp.float32),
            grid_spec=pltpu.PrefetchScalarGridSpec(
                num_scalar_prefetch=0,
                grid=(N, H // TH),
                in_specs=[
                    # The (small-channel) row-padded image stays resident per
                    # batch index; the kernel slices its (TH+2)-row halo window.
                    # TODO(synk): for very large spatial inputs switch x to
                    # memory_space=pl.ANY + a manual halo DMA per stripe.
                    pl.BlockSpec((1, H + 2, W, self.cp),
                                 lambda n, i: (n, 0, 0, 0)),
                    _const_spec((self.cp, self.chp)),
                    _const_spec((1, self.chp)),
                    _const_spec((9, self.chp)),
                    _const_spec((1, self.chp)),
                    _const_spec((self.chp, self.cop)),
                    _const_spec((1, self.cop)),
                ],
                out_specs=pl.BlockSpec((1, TH // s, W_out, self.cop),
                                       lambda n, i: (n, i, 0, 0)),
            ),
            compiler_params=pltpu.CompilerParams(
                dimension_semantics=("parallel", "parallel"),
                vmem_limit_bytes=32 * 1024 * 1024),
        )(x_p, self.w1f, self.b1, self.wdwf, self.bdw, self.w3f, self.b3)

        if return_padded:
            return out_p                      # padded-channel layout (chained use)
        return out_p[..., :self.oup]


def _reference(mod, x_nhwc, eps=1e-5):
    """Pure-JAX reference (inference-mode BN), NHWC, all f32."""
    w1, wdw, w3 = mod.raw["w1"], mod.raw["wdw"], mod.raw["w3"]

    def bn_apply(y, params):
        g, b, m, v = params
        return (y - m) / jnp.sqrt(v + eps) * g + b

    y = jnp.einsum("nhwc,kc->nhwk", x_nhwc, w1[:, :, 0, 0])
    y = jnp.clip(bn_apply(y, mod.raw["bn1"]), 0.0, 6.0)
    y = lax.conv_general_dilated(
        y, jnp.transpose(wdw, (2, 3, 1, 0)),       # HWIO with I=1 (depthwise)
        window_strides=(mod.stride, mod.stride),
        padding=((1, 1), (1, 1)),
        dimension_numbers=("NHWC", "HWIO", "NHWC"),
        feature_group_count=mod.hid)
    y = jnp.clip(bn_apply(y, mod.raw["bn2"]), 0.0, 6.0)
    y = jnp.einsum("nhwc,kc->nhwk", y, w3[:, :, 0, 0])
    y = bn_apply(y, mod.raw["bn3"])
    if mod.use_res_connect:
        y = y + x_nhwc
    return y


if __name__ == "__main__":
    key = jax.random.PRNGKey(0)
    kx, kp1, kp2 = jax.random.split(key, 3)

    N, Cin, H, W = 2, 8, 16, 16
    expand_ratio = 4
    x_nhwc = jax.random.normal(kx, (N, H, W, Cin), jnp.float32)

    # stride=1, inp == oup -> residual path exercised
    mod1 = InvertedResidualPallas(inp=Cin, oup=Cin, stride=1,
                                  expand_ratio=expand_ratio, key=kp1)
    out1 = jax.block_until_ready(mod1(x_nhwc))
    ref1 = _reference(mod1, x_nhwc)
    assert out1.shape == ref1.shape, (out1.shape, ref1.shape)
    err1 = float(jnp.max(jnp.abs(out1 - ref1)))
    # bf16 MXU feeds (f32 accumulation) -> looser tolerance than pure-f32 path
    assert err1 < 5e-2, f"stride-1 max abs err {err1}"

    # stride=2 -> downsampling path (no residual)
    mod2 = InvertedResidualPallas(inp=Cin, oup=16, stride=2,
                                  expand_ratio=expand_ratio, key=kp2)
    out2 = jax.block_until_ready(mod2(x_nhwc))
    ref2 = _reference(mod2, x_nhwc)
    assert out2.shape == ref2.shape, (out2.shape, ref2.shape)
    err2 = float(jnp.max(jnp.abs(out2 - ref2)))
    assert err2 < 5e-2, f"stride-2 max abs err {err2}"

    print("KERNEL_OK")
</pallas_src>

<mosaic_0001>
module attributes {stable_mosaic.version = 11 : i64} {
  func.func @_inverted_residual_kernel(%arg0: i32, %arg1: i32, %arg2: memref<1x18x16x128xf32, #tpu.memory_space<vmem>>, %arg3: memref<128x128xbf16, #tpu.memory_space<vmem>>, %arg4: memref<1x128xf32, #tpu.memory_space<vmem>>, %arg5: memref<9x128xf32, #tpu.memory_space<vmem>>, %arg6: memref<1x128xf32, #tpu.memory_space<vmem>>, %arg7: memref<128x128xbf16, #tpu.memory_space<vmem>>, %arg8: memref<1x128xf32, #tpu.memory_space<vmem>>, %arg9: memref<1x8x16x128xf32, #tpu.memory_space<vmem>>) attributes {dimension_semantics = [#tpu.dimension_semantics<parallel>, #tpu.dimension_semantics<parallel>], iteration_bounds = array<i64: 2, 2>, scalar_prefetch = 0 : i64, scratch_operands = 0 : i64, tpu.core_type = #tpu.core_type<tc>, window_params = [{transform_indices = @transform_0, window_bounds = array<i64: 1, 18, 16, 128>}, {pipeline_mode = #tpu.pipeline_mode<synchronous>, transform_indices = @transform_1, window_bounds = array<i64: 128, 128>}, {pipeline_mode = #tpu.pipeline_mode<synchronous>, transform_indices = @transform_2, window_bounds = array<i64: 1, 128>}, {pipeline_mode = #tpu.pipeline_mode<synchronous>, transform_indices = @transform_3, window_bounds = array<i64: 9, 128>}, {pipeline_mode = #tpu.pipeline_mode<synchronous>, transform_indices = @transform_4, window_bounds = array<i64: 1, 128>}, {pipeline_mode = #tpu.pipeline_mode<synchronous>, transform_indices = @transform_5, window_bounds = array<i64: 128, 128>}, {pipeline_mode = #tpu.pipeline_mode<synchronous>, transform_indices = @transform_6, window_bounds = array<i64: 1, 128>}, {transform_indices = @transform_7, window_bounds = array<i64: 1, 8, 16, 128>}]} {
    %c8_i32 = arith.constant 8 : i32
    %0 = arith.muli %arg1, %c8_i32 : i32
    %1 = tpu.assume_multiple %0, 8 : i32
    %c0 = arith.constant 0 : index
    %2 = arith.index_cast %1 : i32 to index
    %c0_0 = arith.constant 0 : index
    %c0_1 = arith.constant 0 : index
    %3 = vector.load %arg2[%c0, %2, %c0_0, %c0_1] : memref<1x18x16x128xf32, #tpu.memory_space<vmem>>, vector<1x10x16x128xf32>
    %4 = vector.shape_cast %3 : vector<1x10x16x128xf32> to vector<10x16x128xf32>
    %5 = vector.shape_cast %4 : vector<10x16x128xf32> to vector<160x128xf32>
    %6 = arith.truncf %5 : vector<160x128xf32> to vector<160x128xbf16>
    %c0_2 = arith.constant 0 : index
    %c0_3 = arith.constant 0 : index
    %7 = vector.load %arg3[%c0_2, %c0_3] : memref<128x128xbf16, #tpu.memory_space<vmem>>, vector<128x128xbf16>
    %cst = arith.constant dense<0.000000e+00> : vector<160x128xf32>
    %8 = tpu.matmul %6, %7, %cst {dimension_numbers = #tpu.dot_dimension_numbers<[1], [0], [0], [1], [0, 0, 1, 1], [], []>} : vector<160x128xbf16>, vector<128x128xbf16>, vector<160x128xf32> -> vector<160x128xf32>
    %c0_4 = arith.constant 0 : index
    %c0_5 = arith.constant 0 : index
    %9 = vector.load %arg4[%c0_4, %c0_5] : memref<1x128xf32, #tpu.memory_space<vmem>>, vector<1x128xf32>
    %10 = vector.broadcast %9 : vector<1x128xf32> to vector<160x128xf32>
    %11 = arith.addf %8, %10 : vector<160x128xf32>
    %cst_6 = arith.constant 0.000000e+00 : f32
    %cst_7 = arith.constant 6.000000e+00 : f32
    %12 = vector.broadcast %cst_6 : f32 to vector<160x128xf32>
    %13 = arith.maximumf %12, %11 : vector<160x128xf32>
    %14 = vector.broadcast %cst_7 : f32 to vector<160x128xf32>
    %15 = arith.minimumf %14, %13 : vector<160x128xf32>
    %16 = vector.shape_cast %15 : vector<160x128xf32> to vector<10x16x128xf32>
    %c0_8 = arith.constant 0 : index
    %c0_9 = arith.constant 0 : index
    %17 = vector.load %arg5[%c0_8, %c0_9] : memref<9x128xf32, #tpu.memory_space<vmem>>, vector<9x128xf32>
    %18 = vector.extract_strided_slice %17 {offsets = [0, 0], sizes = [1, 128], strides = [1, 1]} : vector<9x128xf32> to vector<1x128xf32>
    %19 = vector.extract_strided_slice %17 {offsets = [1, 0], sizes = [1, 128], strides = [1, 1]} : vector<9x128xf32> to vector<1x128xf32>
    %20 = vector.extract_strided_slice %17 {offsets = [2, 0], sizes = [1, 128], strides = [1, 1]} : vector<9x128xf32> to vector<1x128xf32>
    %21 = vector.extract_strided_slice %17 {offsets = [3, 0], sizes = [1, 128], strides = [1, 1]} : vector<9x128xf32> to vector<1x128xf32>
    %22 = vector.extract_strided_slice %17 {offsets = [4, 0], sizes = [1, 128], strides = [1, 1]} : vector<9x128xf32> to vector<1x128xf32>
    %23 = vector.extract_strided_slice %17 {offsets = [5, 0], sizes = [1, 128], strides = [1, 1]} : vector<9x128xf32> to vector<1x128xf32>
    %24 = vector.extract_strided_slice %17 {offsets = [6, 0], sizes = [1, 128], strides = [1, 1]} : vector<9x128xf32> to vector<1x128xf32>
    %25 = vector.extract_strided_slice %17 {offsets = [7, 0], sizes = [1, 128], strides = [1, 1]} : vector<9x128xf32> to vector<1x128xf32>
    %26 = vector.extract_strided_slice %17 {offsets = [8, 0], sizes = [1, 128], strides = [1, 1]} : vector<9x128xf32> to vector<1x128xf32>
    %27 = tpu.iota {dimensions = array<i32: 0>} : vector<16x128xi32>
    %c0_i32 = arith.constant 0 : i32
    %28 = vector.broadcast %c0_i32 : i32 to vector<16x128xi32>
    %29 = arith.cmpi sgt, %27, %28 : vector<16x128xi32>
    %30 = arith.extui %29 : vector<16x128xi1> to vector<16x128xi32>
    %31 = arith.sitofp %30 : vector<16x128xi32> to vector<16x128xf32>
    %c15_i32 = arith.constant 15 : i32
    %32 = vector.broadcast %c15_i32 : i32 to vector<16x128xi32>
    %33 = arith.cmpi slt, %27, %32 : vector<16x128xi32>
    %34 = arith.extui %33 : vector<16x128xi1> to vector<16x128xi32>
    %35 = arith.sitofp %34 : vector<16x128xi32> to vector<16x128xf32>
    %36 = vector.extract_strided_slice %16 {offsets = [0, 0, 0], sizes = [8, 16, 128], strides = [1, 1, 1]} : vector<10x16x128xf32> to vector<8x16x128xf32>
    %c1_i32 = arith.constant 1 : i32
    %37 = tpu.dynamic_rotate %36 by %c1_i32 dim 1 : vector<8x16x128xf32>, i32 -> vector<8x16x128xf32>
    %38 = vector.shape_cast %31 : vector<16x128xf32> to vector<1x16x128xf32>
    %39 = vector.broadcast %38 : vector<1x16x128xf32> to vector<8x16x128xf32>
    %40 = arith.mulf %37, %39 : vector<8x16x128xf32>
    %c15_i32_10 = arith.constant 15 : i32
    %41 = tpu.dynamic_rotate %36 by %c15_i32_10 dim 1 : vector<8x16x128xf32>, i32 -> vector<8x16x128xf32>
    %42 = vector.shape_cast %35 : vector<16x128xf32> to vector<1x16x128xf32>
    %43 = vector.broadcast %42 : vector<1x16x128xf32> to vector<8x16x128xf32>
    %44 = arith.mulf %41, %43 : vector<8x16x128xf32>
    %45 = vector.shape_cast %18 : vector<1x128xf32> to vector<1x1x128xf32>
    %46 = vector.broadcast %45 : vector<1x1x128xf32> to vector<8x16x128xf32>
    %47 = arith.mulf %40, %46 : vector<8x16x128xf32>
    %48 = vector.shape_cast %19 : vector<1x128xf32> to vector<1x1x128xf32>
    %49 = vector.broadcast %48 : vector<1x1x128xf32> to vector<8x16x128xf32>
    %50 = arith.mulf %36, %49 : vector<8x16x128xf32>
    %51 = arith.addf %47, %50 : vector<8x16x128xf32>
    %52 = vector.shape_cast %20 : vector<1x128xf32> to vector<1x1x128xf32>
    %53 = vector.broadcast %52 : vector<1x1x128xf32> to vector<8x16x128xf32>
    %54 = arith.mulf %44, %53 : vector<8x16x128xf32>
    %55 = arith.addf %51, %54 : vector<8x16x128xf32>
    %56 = vector.extract_strided_slice %16 {offsets = [1, 0, 0], sizes = [8, 16, 128], strides = [1, 1, 1]} : vector<10x16x128xf32> to vector<8x16x128xf32>
    %c1_i32_11 = arith.constant 1 : i32
    %57 = tpu.dynamic_rotate %56 by %c1_i32_11 dim 1 : vector<8x16x128xf32>, i32 -> vector<8x16x128xf32>
    %58 = vector.shape_cast %31 : vector<16x128xf32> to vector<1x16x128xf32>
    %59 = vector.broadcast %58 : vector<1x16x128xf32> to vector<8x16x128xf32>
    %60 = arith.mulf %57, %59 : vector<8x16x128xf32>
    %c15_i32_12 = arith.constant 15 : i32
    %61 = tpu.dynamic_rotate %56 by %c15_i32_12 dim 1 : vector<8x16x128xf32>, i32 -> vector<8x16x128xf32>
    %62 = vector.shape_cast %35 : vector<16x128xf32> to vector<1x16x128xf32>
    %63 = vector.broadcast %62 : vector<1x16x128xf32> to vector<8x16x128xf32>
    %64 = arith.mulf %61, %63 : vector<8x16x128xf32>
    %65 = vector.shape_cast %21 : vector<1x128xf32> to vector<1x1x128xf32>
    %66 = vector.broadcast %65 : vector<1x1x128xf32> to vector<8x16x128xf32>
    %67 = arith.mulf %60, %66 : vector<8x16x128xf32>
    %68 = vector.shape_cast %22 : vector<1x128xf32> to vector<1x1x128xf32>
    %69 = vector.broadcast %68 : vector<1x1x128xf32> to vector<8x16x128xf32>
    %70 = arith.mulf %56, %69 : vector<8x16x128xf32>
    %71 = arith.addf %67, %70 : vector<8x16x128xf32>
    %72 = vector.shape_cast %23 : vector<1x128xf32> to vector<1x1x128xf32>
    %73 = vector.broadcast %72 : vector<1x1x128xf32> to vector<8x16x128xf32>
    %74 = arith.mulf %64, %73 : vector<8x16x128xf32>
    %75 = arith.addf %71, %74 : vector<8x16x128xf32>
    %76 = arith.addf %55, %75 : vector<8x16x128xf32>
    %77 = vector.extract_strided_slice %16 {offsets = [2, 0, 0], sizes = [8, 16, 128], strides = [1, 1, 1]} : vector<10x16x128xf32> to vector<8x16x128xf32>
    %c1_i32_13 = arith.constant 1 : i32
    %78 = tpu.dynamic_rotate %77 by %c1_i32_13 dim 1 : vector<8x16x128xf32>, i32 -> vector<8x16x128xf32>
    %79 = vector.shape_cast %31 : vector<16x128xf32> to vector<1x16x128xf32>
    %80 = vector.broadcast %79 : vector<1x16x128xf32> to vector<8x16x128xf32>
    %81 = arith.mulf %78, %80 : vector<8x16x128xf32>
    %c15_i32_14 = arith.constant 15 : i32
    %82 = tpu.dynamic_rotate %77 by %c15_i32_14 dim 1 : vector<8x16x128xf32>, i32 -> vector<8x16x128xf32>
    %83 = vector.shape_cast %35 : vector<16x128xf32> to vector<1x16x128xf32>
    %84 = vector.broadcast %83 : vector<1x16x128xf32> to vector<8x16x128xf32>
    %85 = arith.mulf %82, %84 : vector<8x16x128xf32>
    %86 = vector.shape_cast %24 : vector<1x128xf32> to vector<1x1x128xf32>
    %87 = vector.broadcast %86 : vector<1x1x128xf32> to vector<8x16x128xf32>
    %88 = arith.mulf %81, %87 : vector<8x16x128xf32>
    %89 = vector.shape_cast %25 : vector<1x128xf32> to vector<1x1x128xf32>
    %90 = vector.broadcast %89 : vector<1x1x128xf32> to vector<8x16x128xf32>
    %91 = arith.mulf %77, %90 : vector<8x16x128xf32>
    %92 = arith.addf %88, %91 : vector<8x16x128xf32>
    %93 = vector.shape_cast %26 : vector<1x128xf32> to vector<1x1x128xf32>
    %94 = vector.broadcast %93 : vector<1x1x128xf32> to vector<8x16x128xf32>
    %95 = arith.mulf %85, %94 : vector<8x16x128xf32>
    %96 = arith.addf %92, %95 : vector<8x16x128xf32>
    %97 = arith.addf %76, %96 : vector<8x16x128xf32>
    %98 = vector.shape_cast %97 : vector<8x16x128xf32> to vector<128x128xf32>
    %c0_15 = arith.constant 0 : index
    %c0_16 = arith.constant 0 : index
    %99 = vector.load %arg6[%c0_15, %c0_16] : memref<1x128xf32, #tpu.memory_space<vmem>>, vector<1x128xf32>
    %100 = vector.broadcast %99 : vector<1x128xf32> to vector<128x128xf32>
    %101 = arith.addf %98, %100 : vector<128x128xf32>
    %cst_17 = arith.constant 0.000000e+00 : f32
    %cst_18 = arith.constant 6.000000e+00 : f32
    %102 = vector.broadcast %cst_17 : f32 to vector<128x128xf32>
    %103 = arith.maximumf %102, %101 : vector<128x128xf32>
    %104 = vector.broadcast %cst_18 : f32 to vector<128x128xf32>
    %105 = arith.minimumf %104, %103 : vector<128x128xf32>
    %106 = arith.truncf %105 : vector<128x128xf32> to vector<128x128xbf16>
    %c0_19 = arith.constant 0 : index
    %c0_20 = arith.constant 0 : index
    %107 = vector.load %arg7[%c0_19, %c0_20] : memref<128x128xbf16, #tpu.memory_space<vmem>>, vector<128x128xbf16>
    %cst_21 = arith.constant dense<0.000000e+00> : vector<128x128xf32>
    %108 = tpu.matmul %106, %107, %cst_21 {dimension_numbers = #tpu.dot_dimension_numbers<[1], [0], [0], [1], [0, 0, 1, 1], [], []>} : vector<128x128xbf16>, vector<128x128xbf16>, vector<128x128xf32> -> vector<128x128xf32>
    %c0_22 = arith.constant 0 : index
    %c0_23 = arith.constant 0 : index
    %109 = vector.load %arg8[%c0_22, %c0_23] : memref<1x128xf32, #tpu.memory_space<vmem>>, vector<1x128xf32>
    %110 = vector.broadcast %109 : vector<1x128xf32> to vector<128x128xf32>
    %111 = arith.addf %108, %110 : vector<128x128xf32>
    %112 = vector.extract_strided_slice %4 {offsets = [1, 0, 0], sizes = [8, 16, 128], strides = [1, 1, 1]} : vector<10x16x128xf32> to vector<8x16x128xf32>
    %113 = vector.shape_cast %112 : vector<8x16x128xf32> to vector<128x128xf32>
    %114 = arith.addf %111, %113 : vector<128x128xf32>
    %115 = vector.shape_cast %114 : vector<128x128xf32> to vector<8x16x128xf32>
    %c0_24 = arith.constant 0 : index
    %c0_25 = arith.constant 0 : index
    %c0_26 = arith.constant 0 : index
    %c0_27 = arith.constant 0 : index
    %116 = vector.load %arg9[%c0_24, %c0_25, %c0_26, %c0_27] : memref<1x8x16x128xf32, #tpu.memory_space<vmem>>, vector<1x8x16x128xf32>
    %117 = vector.shape_cast %116 : vector<1x8x16x128xf32> to vector<8x16x128xf32>
    %118 = vector.shape_cast %115 : vector<8x16x128xf32> to vector<1x8x16x128xf32>
    tpu.vector_store %arg9[%c0_24, %c0_25, %c0_26, %c0_27], %118 {strides = array<i32>} : memref<1x8x16x128xf32, #tpu.memory_space<vmem>>, vector<1x8x16x128xf32>,
    return
  }
  func.func @transform_0(%arg0: i32, %arg1: i32) -> (i32, i32, i32, i32) {
    %c0_i32 = arith.constant 0 : i32
    %c0_i32_0 = arith.constant 0 : i32
    %c0_i32_1 = arith.constant 0 : i32
    %c0_i32_2 = arith.constant 0 : i32
    return %arg0, %c0_i32, %c0_i32_0, %c0_i32_1 : i32, i32, i32, i32
  }
  func.func @transform_1(%arg0: i32, %arg1: i32) -> (i32, i32) {
    %c0_i32 = arith.constant 0 : i32
    %c0_i32_0 = arith.constant 0 : i32
    %c0_i32_1 = arith.constant 0 : i32
    return %c0_i32, %c0_i32_0 : i32, i32
  }
  func.func @transform_2(%arg0: i32, %arg1: i32) -> (i32, i32) {
    %c0_i32 = arith.constant 0 : i32
    %c0_i32_0 = arith.constant 0 : i32
    %c0_i32_1 = arith.constant 0 : i32
    return %c0_i32, %c0_i32_0 : i32, i32
  }
  func.func @transform_3(%arg0: i32, %arg1: i32) -> (i32, i32) {
    %c0_i32 = arith.constant 0 : i32
    %c0_i32_0 = arith.constant 0 : i32
    %c0_i32_1 = arith.constant 0 : i32
    return %c0_i32, %c0_i32_0 : i32, i32
  }
  func.func @transform_4(%arg0: i32, %arg1: i32) -> (i32, i32) {
    %c0_i32 = arith.constant 0 : i32
    %c0_i32_0 = arith.constant 0 : i32
    %c0_i32_1 = arith.constant 0 : i32
    return %c0_i32, %c0_i32_0 : i32, i32
  }
  func.func @transform_5(%arg0: i32, %arg1: i32) -> (i32, i32) {
    %c0_i32 = arith.constant 0 : i32
    %c0_i32_0 = arith.constant 0 : i32
    %c0_i32_1 = arith.constant 0 : i32
    return %c0_i32, %c0_i32_0 : i32, i32
  }
  func.func @transform_6(%arg0: i32, %arg1: i32) -> (i32, i32) {
    %c0_i32 = arith.constant 0 : i32
    %c0_i32_0 = arith.constant 0 : i32
    %c0_i32_1 = arith.constant 0 : i32
    return %c0_i32, %c0_i32_0 : i32, i32
  }
  func.func @transform_7(%arg0: i32, %arg1: i32) -> (i32, i32, i32, i32) {
    %c0_i32 = arith.constant 0 : i32
    %c0_i32_0 = arith.constant 0 : i32
    %c0_i32_1 = arith.constant 0 : i32
    return %arg0, %arg1, %c0_i32, %c0_i32_0 : i32, i32, i32, i32
  }
}

</mosaic_0001>

<llo_original>
// kernel: tpu_custom_call.1
$region0: #{tpu_custom_call.1}
  #allocation0 [shape = 'u32[]', space=smem, size = 0x4, offset = 0x4, fixed_abs, tag = 'smem constant byte address 0x4 - core index']
  #allocation1 [shape = 'u32[144,128]{1,0:T(1,128)}', space=vmem, size = 0x12000, scoped, tag = 'internal scratch']
  %s0 = inlined_call_operand.hbm [shape: f32[2,18,16,128], index: 0, kind: input, shape index: {}]
  %s1 = inlined_call_operand.hbm [shape: bf16[128,128], index: 1, kind: input, shape index: {}]
  %s2 = inlined_call_operand.vmem [shape: f32[1,128], index: 2, kind: input, shape index: {}]
  %s3 = inlined_call_operand.hbm [shape: f32[9,128], index: 3, kind: input, shape index: {}]
  %s4 = inlined_call_operand.vmem [shape: f32[1,128], index: 4, kind: input, shape index: {}]
  %s5 = inlined_call_operand.hbm [shape: bf16[128,128], index: 5, kind: input, shape index: {}]
  %s6 = inlined_call_operand.vmem [shape: f32[1,128], index: 6, kind: input, shape index: {}]
  %s7 = inlined_call_operand.hbm [shape: f32[2,16,16,128], index: 7, kind: output, shape index: {}]
  %s8 = sld [smem:[#allocation0]]
  $region77: #{tpu_custom_call.1} parent=0
    _
  %s10 = ssub.s32 1, %s8
  %s11 = scalar_select 0, %s10, %s8
  $region1: #{tpu_custom_call.1} parent=0
    #allocation2 [shape = 'u8[294912]{0}', space=vmem, size = 0x48000, scoped, tag = 'input window, operand 0']
    #allocation3 [shape = 's32[2]{0}', space=sflag, size = 0x8, scoped, tag = 'scoped memory for tpu_custom_call.1']
    #allocation4 [shape = 's32[2]{0}', space=sflag, size = 0x8, scoped, tag = 'scoped memory for tpu_custom_call.1']
    #allocation5 [shape = 'u8[32768]{0}', space=vmem, size = 0x8000, scoped, tag = 'input window, operand 1, single buffered']
    #allocation6 [shape = 's32[1]{0}', space=sflag, size = 0x4, scoped, tag = 'scoped memory for tpu_custom_call.1']
    #allocation7 [shape = 'u8[8192]{0}', space=vmem, size = 0x2000, scoped, tag = 'input window, operand 3, single buffered']
    #allocation8 [shape = 'u8[32768]{0}', space=vmem, size = 0x8000, scoped, tag = 'input window, operand 5, single buffered']
    #allocation9 [shape = 's32[1]{0}', space=sflag, size = 0x4, scoped, tag = 'scoped memory for tpu_custom_call.1']
    #allocation10 [shape = 'u8[131072]{0}', space=vmem, size = 0x20000, scoped, tag = 'output window, operand 0']
    %12 = vsyncpa [#allocation3], 0
    %s13 = scalar_lea.sflag [#allocation3], 1
    %14 = vsyncpa %s13, 0
    %15 = vsyncpa [#allocation6], 0
    %16 = vsyncpa [#allocation9], 0
    %17 = vsyncpa [#allocation4], 0
    %s18 = scalar_lea.sflag [#allocation4], 1
    %19 = vsyncpa %s18, 0
    loop: start=0, step=1, limit=6
    $region2: #{tpu_custom_call.1} parent=1 // loop_pre_header
      _
    $region3: #{tpu_custom_call.1} parent=1 // loop_header
      %s21 = sphi 0, %s25
      %p22 = scmp.ge.s32.totalorder %s21, 6
      %s28 = sphi 0, %s40
      %s29 = sphi 0, %s36
      %s30 = sphi 0, %s28
      %s31 = sphi 0, %s29
      %s32 = sphi 0, %s30
      %s33 = sphi 0, %s31
      %s43 = sphi 0, %s45
      %s46 = sphi 0, %s43
      %s47 = sphi 0, %s46
      %s63 = sphi 0, %s47
      %s67 = sphi 0, %s67
      %s69 = sphi 0, %s67
      %s70 = sphi 0, %s69
      %s84 = sphi 0, %s70
      %s88 = sphi 0, %s88
      %s90 = sphi 0, %s88
      %s91 = sphi 0, %s90
      %s105 = sphi 0, %s91
      %s109 = sphi 0, %s109
      %s111 = sphi 0, %s109
      %s112 = sphi 0, %s111
      %s126 = sphi 0, %s112
      %s130 = sphi 0, %s130
      %s132 = sphi 0, %s130
      %s133 = sphi 0, %s132
      %s147 = sphi 0, %s133
      %s151 = sphi 0, %s151
      %s153 = sphi 0, %s151
      %s154 = sphi 0, %s153
      %s168 = sphi 0, %s154
      %s172 = sphi 0, %s172
      %s174 = sphi 0, %s172
      %s175 = sphi 0, %s174
      %s189 = sphi 0, %s175
      %s197 = sphi 0, %s199
      %s200 = sphi 0, %s197
      %s201 = sphi 0, %s200
      %s217 = sphi 0, %s201
    $region4: #{tpu_custom_call.1} parent=1 // loop_header_branch
      %24 = sbr.rel (%p22) target = $region8
    $region5: #{tpu_custom_call.1} parent=1 // loop_body
      %s26 = ssub.s32 %s21, 1
      %s27 = ssub.s32 %s21, 2
      %s34 = sadd.s32 1, %s29
      %p35 = scmp.ge.s32.totalorder %s34, 2
      %s36 = scalar_select %p35, 0, %s34
      %s37 = sadd.s32 1, %s28
      %s38 = scalar_select %p35, %s37, %s28
      %p39 = scmp.ge.s32.totalorder %s38, 2
      %s40 = scalar_select %p39, 0, %s38
      %s41 = ssub.s32 %s28, %s40
      %p42 = scmp.eq.s32.totalorder %s41, 0
      %s44 = sadd.s32 %s43, 1
      %s45 = scalar_select %p42, %s43, %s44
      %p48 = pneg %p42
      %p49 = scmp.eq.s32.totalorder %s21, 3
      %p50 = por %p48, %p49
      %p51 = scmp.ne.s32.totalorder %s43, %s46
      %p52 = scmp.eq.s32.totalorder %s21, 0
      %p53 = por %p51, %p52
      %p54 = scmp.ne.s32.totalorder %s43, %s46
      %p55 = scmp.eq.s32.totalorder %s26, 3
      %p56 = por %p54, %p55
      %p57 = scmp.ne.s32.totalorder %s46, %s47
      %p58 = scmp.eq.s32.totalorder %s26, 0
      %p59 = por %p57, %p58
      %p60 = scmp.ne.s32.totalorder %s46, %s47
      %p61 = scmp.eq.s32.totalorder %s27, 3
      %p62 = por %p60, %p61
      %p64 = scmp.ne.s32.totalorder %s47, %s63
      %p65 = scmp.eq.s32.totalorder %s27, 0
      %p66 = por %p64, %p65
      %s68 = sadd.s32 %s67, 1
      %p71 = scmp.eq.s32.totalorder %s21, 3
      %p72 = scmp.ne.s32.totalorder %s67, %s69
      %p73 = scmp.eq.s32.totalorder %s21, 0
      %p74 = por %p72, %p73
      %p75 = scmp.ne.s32.totalorder %s67, %s69
      %p76 = scmp.eq.s32.totalorder %s26, 3
      %p77 = por %p75, %p76
      %p78 = scmp.ne.s32.totalorder %s69, %s70
      %p79 = scmp.eq.s32.totalorder %s26, 0
      %p80 = por %p78, %p79
      %p81 = scmp.ne.s32.totalorder %s69, %s70
      %p82 = scmp.eq.s32.totalorder %s27, 3
      %p83 = por %p81, %p82
      %p85 = scmp.ne.s32.totalorder %s70, %s84
      %p86 = scmp.eq.s32.totalorder %s27, 0
      %p87 = por %p85, %p86
      %s89 = sadd.s32 %s88, 1
      %p92 = scmp.eq.s32.totalorder %s21, 3
      %p93 = scmp.ne.s32.totalorder %s88, %s90
      %p94 = scmp.eq.s32.totalorder %s21, 0
      %p95 = por %p93, %p94
      %p96 = scmp.ne.s32.totalorder %s88, %s90
      %p97 = scmp.eq.s32.totalorder %s26, 3
      %p98 = por %p96, %p97
      %p99 = scmp.ne.s32.totalorder %s90, %s91
      %p100 = scmp.eq.s32.totalorder %s26, 0
      %p101 = por %p99, %p100
      %p102 = scmp.ne.s32.totalorder %s90, %s91
      %p103 = scmp.eq.s32.totalorder %s27, 3
      %p104 = por %p102, %p103
      %p106 = scmp.ne.s32.totalorder %s91, %s105
      %p107 = scmp.eq.s32.totalorder %s27, 0
      %p108 = por %p106, %p107
      %s110 = sadd.s32 %s109, 1
      %p113 = scmp.eq.s32.totalorder %s21, 3
      %p114 = scmp.ne.s32.totalorder %s109, %s111
      %p115 = scmp.eq.s32.totalorder %s21, 0
      %p116 = por %p114, %p115
      %p117 = scmp.ne.s32.totalorder %s109, %s111
      %p118 = scmp.eq.s32.totalorder %s26, 3
      %p119 = por %p117, %p118
      %p120 = scmp.ne.s32.totalorder %s111, %s112
      %p121 = scmp.eq.s32.totalorder %s26, 0
      %p122 = por %p120, %p121
      %p123 = scmp.ne.s32.totalorder %s111, %s112
      %p124 = scmp.eq.s32.totalorder %s27, 3
      %p125 = por %p123, %p124
      %p127 = scmp.ne.s32.totalorder %s112, %s126
      %p128 = scmp.eq.s32.totalorder %s27, 0
      %p129 = por %p127, %p128
      %s131 = sadd.s32 %s130, 1
      %p134 = scmp.eq.s32.totalorder %s21, 3
      %p135 = scmp.ne.s32.totalorder %s130, %s132
      %p136 = scmp.eq.s32.totalorder %s21, 0
      %p137 = por %p135, %p136
      %p138 = scmp.ne.s32.totalorder %s130, %s132
      %p139 = scmp.eq.s32.totalorder %s26, 3
      %p140 = por %p138, %p139
      %p141 = scmp.ne.s32.totalorder %s132, %s133
      %p142 = scmp.eq.s32.totalorder %s26, 0
      %p143 = por %p141, %p142
      %p144 = scmp.ne.s32.totalorder %s132, %s133
      %p145 = scmp.eq.s32.totalorder %s27, 3
      %p146 = por %p144, %p145
      %p148 = scmp.ne.s32.totalorder %s133, %s147
      %p149 = scmp.eq.s32.totalorder %s27, 0
      %p150 = por %p148, %p149
      %s152 = sadd.s32 %s151, 1
      %p155 = scmp.eq.s32.totalorder %s21, 3
      %p156 = scmp.ne.s32.totalorder %s151, %s153
      %p157 = scmp.eq.s32.totalorder %s21, 0
      %p158 = por %p156, %p157
      %p159 = scmp.ne.s32.totalorder %s151, %s153
      %p160 = scmp.eq.s32.totalorder %s26, 3
      %p161 = por %p159, %p160
      %p162 = scmp.ne.s32.totalorder %s153, %s154
      %p163 = scmp.eq.s32.totalorder %s26, 0
      %p164 = por %p162, %p163
      %p165 = scmp.ne.s32.totalorder %s153, %s154
      %p166 = scmp.eq.s32.totalorder %s27, 3
      %p167 = por %p165, %p166
      %p169 = scmp.ne.s32.totalorder %s154, %s168
      %p170 = scmp.eq.s32.totalorder %s27, 0
      %p171 = por %p169, %p170
      %s173 = sadd.s32 %s172, 1
      %p176 = scmp.eq.s32.totalorder %s21, 3
      %p177 = scmp.ne.s32.totalorder %s172, %s174
      %p178 = scmp.eq.s32.totalorder %s21, 0
      %p179 = por %p177, %p178
      %p180 = scmp.ne.s32.totalorder %s172, %s174
      %p181 = scmp.eq.s32.totalorder %s26, 3
      %p182 = por %p180, %p181
      %p183 = scmp.ne.s32.totalorder %s174, %s175
      %p184 = scmp.eq.s32.totalorder %s26, 0
      %p185 = por %p183, %p184
      %p186 = scmp.ne.s32.totalorder %s174, %s175
      %p187 = scmp.eq.s32.totalorder %s27, 3
      %p188 = por %p186, %p187
      %p190 = scmp.ne.s32.totalorder %s175, %s189
      %p191 = scmp.eq.s32.totalorder %s27, 0
      %p192 = por %p190, %p191
      %s193 = ssub.s32 %s28, %s40
      %s194 = ssub.s32 %s29, %s36
      %s195 = sor.u32 %s193, %s194
      %p196 = scmp.eq.s32.totalorder %s195, 0
      %s198 = sadd.s32 %s197, 1
      %s199 = scalar_select %p196, %s197, %s198
      %p202 = pneg %p196
      %p203 = scmp.eq.s32.totalorder %s21, 3
      %p204 = por %p202, %p203
      %p205 = scmp.ne.s32.totalorder %s197, %s200
      %p206 = scmp.eq.s32.totalorder %s21, 0
      %p207 = por %p205, %p206
      %p208 = scmp.ne.s32.totalorder %s197, %s200
      %p209 = scmp.eq.s32.totalorder %s26, 3
      %p210 = por %p208, %p209
      %p211 = scmp.ne.s32.totalorder %s200, %s201
      %p212 = scmp.eq.s32.totalorder %s26, 0
      %p213 = por %p211, %p212
      %p214 = scmp.ne.s32.totalorder %s200, %s201
      %p215 = scmp.eq.s32.totalorder %s27, 3
      %p216 = por %p214, %p215
      %p218 = scmp.ne.s32.totalorder %s201, %s217
      %p219 = scmp.eq.s32.totalorder %s27, 0
      %p220 = por %p218, %p219
      %p221 = scmp.le.s32.totalorder 1, %s21
      %p222 = scmp.lt.s32.totalorder %s21, 5
      %p223 = pnand %p221, %p222
      %p224 = pneg %p223
      // Predicated region
      $region9: #{tpu_custom_call.1} parent=5 // pred_check
        _
      $region10: #{tpu_custom_call.1} parent=5 // pred_check_branch
        %226 = sbr.rel (%p223) target = $region12
      $region11: #{tpu_custom_call.1} parent=5 // pred_region
        %s227 = ssub.s32 %s21, 1
        // Predicated region
        $region13: #{tpu_custom_call.1} parent=11 // pred_check
          %p228 = pneg %p80
        $region14: #{tpu_custom_call.1} parent=11 // pred_check_branch
          %230 = sbr.rel (%p228) target = $region16
        $region15: #{tpu_custom_call.1} parent=11 // pred_region
          %s232 = ssub.s32 1024, 1024
          %233 = vsyncadd [#allocation6], %s232
          %s234 = sshll.u32 [#allocation5], 4
          %s235 = int_to_ptr.vmem [resolvable:$true] %s234
          %240 = dma.hbm_to_vmem [thread:$0]  %s1, 1024, %s235, [#allocation6], 64, 64, 4
        $region16: #{tpu_custom_call.1} parent=11 // pred_fallthru
          _
        // Predicated region
        $region17: #{tpu_custom_call.1} parent=11 // pred_check
          %p241 = pneg %p101
        $region18: #{tpu_custom_call.1} parent=11 // pred_check_branch
          %243 = sbr.rel (%p241) target = $region20
        $region19: #{tpu_custom_call.1} parent=11 // pred_region
          _
        $region20: #{tpu_custom_call.1} parent=11 // pred_fallthru
          _
        // Predicated region
        $region21: #{tpu_custom_call.1} parent=11 // pred_check
          %p244 = pneg %p122
        $region22: #{tpu_custom_call.1} parent=11 // pred_check_branch
          %246 = sbr.rel (%p244) target = $region24
        $region23: #{tpu_custom_call.1} parent=11 // pred_region
          %s248 = ssub.s32 256, 256
          %249 = vsyncadd [#allocation6], %s248
          %s250 = sshll.u32 [#allocation7], 4
          %s251 = int_to_ptr.vmem [resolvable:$true] %s250
          %256 = dma.hbm_to_vmem [thread:$0]  %s3, 256, %s251, [#allocation6], 128, 128, 8
        $region24: #{tpu_custom_call.1} parent=11 // pred_fallthru
          _
        // Predicated region
        $region25: #{tpu_custom_call.1} parent=11 // pred_check
          %p257 = pneg %p143
        $region26: #{tpu_custom_call.1} parent=11 // pred_check_branch
          %259 = sbr.rel (%p257) target = $region28
        $region27: #{tpu_custom_call.1} parent=11 // pred_region
          _
        $region28: #{tpu_custom_call.1} parent=11 // pred_fallthru
          _
        // Predicated region
        $region29: #{tpu_custom_call.1} parent=11 // pred_check
          %p260 = pneg %p164
        $region30: #{tpu_custom_call.1} parent=11 // pred_check_branch
          %262 = sbr.rel (%p260) target = $region32
        $region31: #{tpu_custom_call.1} parent=11 // pred_region
          %s264 = ssub.s32 1024, 1024
          %265 = vsyncadd [#allocation9], %s264
          %s266 = sshll.u32 [#allocation8], 4
          %s267 = int_to_ptr.vmem [resolvable:$true] %s266
          %272 = dma.hbm_to_vmem [thread:$0]  %s5, 1024, %s267, [#allocation9], 64, 64, 4
        $region32: #{tpu_custom_call.1} parent=11 // pred_fallthru
          _
        // Predicated region
        $region33: #{tpu_custom_call.1} parent=11 // pred_check
          %p273 = pneg %p185
        $region34: #{tpu_custom_call.1} parent=11 // pred_check_branch
          %275 = sbr.rel (%p273) target = $region36
        $region35: #{tpu_custom_call.1} parent=11 // pred_region
          _
        $region36: #{tpu_custom_call.1} parent=11 // pred_fallthru
          _
      $region12: #{tpu_custom_call.1} parent=5 // pred_fallthru
        _
      %p276 = scmp.lt.s32.totalorder %s21, 4
      // Predicated region
      $region37: #{tpu_custom_call.1} parent=5 // pred_check
        %p277 = pneg %p276
      $region38: #{tpu_custom_call.1} parent=5 // pred_check_branch
        %279 = sbr.rel (%p277) target = $region40
      $region39: #{tpu_custom_call.1} parent=5 // pred_region
        // Predicated region
        $region41: #{tpu_custom_call.1} parent=39 // pred_check
          %p280 = pneg %p53
        $region42: #{tpu_custom_call.1} parent=39 // pred_check_branch
          %282 = sbr.rel (%p280) target = $region44
        $region43: #{tpu_custom_call.1} parent=39 // pred_region
          %s283 = sand.u32 %s43, 1
          %s284 = scalar_lea.sflag [#allocation3], %s283
          %s285 = sand.u32 %s43, 1
          %s286 = smul.addr %s285, 288
          %s287 = scalar_lea.vmem [#allocation2], %s286
          %s289 = ssub.s32 4608, 4608
          %290 = vsyncadd %s284, %s289
          %s291 = smul.addr %s28, 36
          %s292 = smul.addr %s291, 128
          %s293 = scalar_lea.hbm %s0, %s292
          %s294 = sshll.u32 %s287, 4
          %s295 = int_to_ptr.vmem [resolvable:$true] %s294
          %300 = dma.hbm_to_vmem [thread:$0]  %s293, 4608, %s295, %s284, 128, 128, 8
        $region44: #{tpu_custom_call.1} parent=39 // pred_fallthru
          _
      $region40: #{tpu_custom_call.1} parent=5 // pred_fallthru
        _
      %p301 = scmp.le.s32.totalorder 1, %s21
      %p302 = scmp.lt.s32.totalorder %s21, 5
      %p303 = pnand %p301, %p302
      %p304 = pneg %p303
      // Predicated region
      $region45: #{tpu_custom_call.1} parent=5 // pred_check
        _
      $region46: #{tpu_custom_call.1} parent=5 // pred_check_branch
        %306 = sbr.rel (%p303) target = $region48
      $region47: #{tpu_custom_call.1} parent=5 // pred_region
        %s307 = ssub.s32 %s21, 1
        %s308 = sand.u32 %s46, 1
        %s309 = scalar_lea.sflag [#allocation3], %s308
        %s310 = sand.u32 %s46, 1
        %s311 = smul.addr %s310, 288
        %s312 = scalar_lea.vmem [#allocation2], %s311
        // Predicated region
        $region49: #{tpu_custom_call.1} parent=47 // pred_check
          %p313 = pneg %p59
        $region50: #{tpu_custom_call.1} parent=47 // pred_check_branch
          %315 = sbr.rel (%p313) target = $region52
        $region51: #{tpu_custom_call.1} parent=47 // pred_region
          %316 = dma.done %s309, 4608
        $region52: #{tpu_custom_call.1} parent=47 // pred_fallthru
          _
        // Predicated region
        $region53: #{tpu_custom_call.1} parent=47 // pred_check
          %p317 = pneg %p80
        $region54: #{tpu_custom_call.1} parent=47 // pred_check_branch
          %319 = sbr.rel (%p317) target = $region56
        $region55: #{tpu_custom_call.1} parent=47 // pred_region
          %320 = dma.done [#allocation6], 1024
        $region56: #{tpu_custom_call.1} parent=47 // pred_fallthru
          _
        // Predicated region
        $region57: #{tpu_custom_call.1} parent=47 // pred_check
          %p321 = pneg %p122
        $region58: #{tpu_custom_call.1} parent=47 // pred_check_branch
          %323 = sbr.rel (%p321) target = $region60
        $region59: #{tpu_custom_call.1} parent=47 // pred_region
          %324 = dma.done [#allocation6], 256
        $region60: #{tpu_custom_call.1} parent=47 // pred_fallthru
          _
        // Predicated region
        $region61: #{tpu_custom_call.1} parent=47 // pred_check
          %p325 = pneg %p164
        $region62: #{tpu_custom_call.1} parent=47 // pred_check_branch
          %327 = sbr.rel (%p325) target = $region64
        $region63: #{tpu_custom_call.1} parent=47 // pred_region
          %328 = dma.done [#allocation9], 1024
        $region64: #{tpu_custom_call.1} parent=47 // pred_fallthru
          _
        %s329 = sand.u32 %s46, 1
        %s330 = scalar_lea.sflag [#allocation3], %s329
        %s331 = sand.u32 %s46, 1
        %s332 = smul.addr %s331, 288
        %s333 = scalar_lea.vmem [#allocation2], %s332
        %p334 = pneg %p59
        %p335 = pneg %p56
        %p336 = pneg %p80
        %p337 = pneg %p77
        %p338 = pneg %p101
        %p339 = pneg %p98
        %p340 = pneg %p122
        %p341 = pneg %p119
        %p342 = pneg %p143
        %p343 = pneg %p140
        %p344 = pneg %p164
        %p345 = pneg %p161
        %p346 = pneg %p185
        %p347 = pneg %p182
        %p348 = pneg %p213
        %p349 = pneg %p210
        %s350 = sand.u32 %s200, 1
        %s351 = scalar_lea.sflag [#allocation4], %s350
        %s352 = sand.u32 %s200, 1
        %s353 = smul.addr %s352, 128
        %s354 = scalar_lea.vmem [#allocation10], %s353
        %s355 = smul.u32 8, %s31
        %s357 = smul.u32 %s31, 8
        %s358 = smul.u32 %s357, 16
        %s359 = scalar_lea.vmem %s312, %s358 [#allocation2]
        %v360 = vld [vmem:[%s359] sm:$0xff]
        %v361 = vld [vmem:[%s359 + $0x8] sm:$0xff]
        %v362 = vld [vmem:[%s359 + $0x10] sm:$0xff]
        %v363 = vld [vmem:[%s359 + $0x18] sm:$0xff]
        %v364 = vld [vmem:[%s359 + $0x20] sm:$0xff]
        %v365 = vld [vmem:[%s359 + $0x28] sm:$0xff]
        %v366 = vld [vmem:[%s359 + $0x30] sm:$0xff]
        %v367 = vld [vmem:[%s359 + $0x38] sm:$0xff]
        %v368 = vld [vmem:[%s359 + $0x40] sm:$0xff]
        %v369 = vld [vmem:[%s359 + $0x48] sm:$0xff]
        %v370 = vld [vmem:[%s359 + $0x50] sm:$0xff]
        %v371 = vld [vmem:[%s359 + $0x58] sm:$0xff]
        %v372 = vld [vmem:[%s359 + $0x60] sm:$0xff]
        %v373 = vld [vmem:[%s359 + $0x68] sm:$0xff]
        %v374 = vld [vmem:[%s359 + $0x70] sm:$0xff]
        %v375 = vld [vmem:[%s359 + $0x78] sm:$0xff]
        %v376 = vld [vmem:[%s359 + $0x80] sm:$0xff]
        %v377 = vld [vmem:[%s359 + $0x88] sm:$0xff]
        %v378 = vld [vmem:[%s359 + $0x90] sm:$0xff]
        %v379 = vld [vmem:[%s359 + $0x98] sm:$0xff]
        %v380 = vpack.c.bf16 %v361, %v360
        %v381 = vpack.c.bf16 %v363, %v362
        %v382 = vpack.c.bf16 %v365, %v364
        %v383 = vpack.c.bf16 %v367, %v366
        %v384 = vpack.c.bf16 %v369, %v368
        %v385 = vpack.c.bf16 %v371, %v370
        %v386 = vpack.c.bf16 %v373, %v372
        %v387 = vpack.c.bf16 %v375, %v374
        %v388 = vpack.c.bf16 %v377, %v376
        %v389 = vpack.c.bf16 %v379, %v378
        %v390 = vld [vmem:[#allocation5] sm:$0xf]
        %v391 = vld [vmem:[#allocation5 + $0x4] sm:$0xf]
        %v392 = vld [vmem:[#allocation5 + $0x8] sm:$0xf]
        %v393 = vld [vmem:[#allocation5 + $0xc] sm:$0xf]
        %v394 = vld [vmem:[#allocation5 + $0x10] sm:$0xf]
        %v395 = vld [vmem:[#allocation5 + $0x14] sm:$0xf]
        %v396 = vld [vmem:[#allocation5 + $0x18] sm:$0xf]
        %v397 = vld [vmem:[#allocation5 + $0x1c] sm:$0xf]
        %v398 = vld [vmem:[#allocation5 + $0x20] sm:$0xf]
        %v399 = vld [vmem:[#allocation5 + $0x24] sm:$0xf]
        %v400 = vld [vmem:[#allocation5 + $0x28] sm:$0xf]
        %v401 = vld [vmem:[#allocation5 + $0x2c] sm:$0xf]
        %v402 = vld [vmem:[#allocation5 + $0x30] sm:$0xf]
        %v403 = vld [vmem:[#allocation5 + $0x34] sm:$0xf]
        %v404 = vld [vmem:[#allocation5 + $0x38] sm:$0xf]
        %v405 = vld [vmem:[#allocation5 + $0x3c] sm:$0xf]
        %v406 = vld [vmem:[%s2] sm:$0x1]
        %v408 = vlaneseq
        %v409 = vshrl.u32 %v408, 7
        %v410 = vsub.s32 0, %v409
        %v411 = vrot.slane %v406, %v410
        %v429 = vunpack.c.l.b16 %v390
        %v430 = vunpack.c.l.b16 %v391
        %v431 = vunpack.c.l.b16 %v392
        %v432 = vunpack.c.l.b16 %v393
        %v433 = vunpack.c.l.b16 %v394
        %v434 = vunpack.c.l.b16 %v395
        %v435 = vunpack.c.l.b16 %v396
        %v436 = vunpack.c.l.b16 %v397
        %v437 = vunpack.c.l.b16 %v398
        %v438 = vunpack.c.l.b16 %v399
        %v439 = vunpack.c.l.b16 %v400
        %v440 = vunpack.c.l.b16 %v401
        %v441 = vunpack.c.l.b16 %v402
        %v442 = vunpack.c.l.b16 %v403
        %v443 = vunpack.c.l.b16 %v404
        %v444 = vunpack.c.l.b16 %v405
        %v445 = vpack.c.b16 %v430, %v429
        %v446 = vpack.c.b16 %v432, %v431
        %v447 = vpack.c.b16 %v434, %v433
        %v448 = vpack.c.b16 %v436, %v435
        %v449 = vpack.c.b16 %v438, %v437
        %v450 = vpack.c.b16 %v440, %v439
        %v451 = vpack.c.b16 %v442, %v441
        %v452 = vpack.c.b16 %v444, %v443
        %461 = vmatprep.subr.bf16.mxu0 0
        %462 = vmatpush1.bf16.msra.mxu0 %v452
        %463 = vmatprep.subr.bf16.mxu0 0
        %464 = vmatpush1.bf16.msra.mxu0 %v451
        %465 = vmatprep.subr.bf16.mxu0 0
        %466 = vmatpush1.bf16.msra.mxu0 %v450
        %467 = vmatprep.subr.bf16.mxu0 0
        %468 = vmatpush1.bf16.msra.mxu0 %v449
        %469 = vmatprep.subr.bf16.mxu0 0
        %470 = vmatpush1.bf16.msra.mxu0 %v448
        %471 = vmatprep.subr.bf16.mxu0 0
        %472 = vmatpush1.bf16.msra.mxu0 %v447
        %473 = vmatprep.subr.bf16.mxu0 0
        %474 = vmatpush1.bf16.msra.mxu0 %v446
        %475 = vmatprep.subr.bf16.mxu0 0
        %476 = vmatpush1.bf16.msra.mxu0 %v445
        %477 = vmatprep.subr.bf16.mxu0 0
        %478 = vmatpush2.bf16.msra.mxu0 0
        %479 = vmatprep.subr.bf16.mxu0 0
        %480 = vmatpush2.bf16.msra.mxu0 0
        %481 = vmatprep.subr.bf16.mxu0 0
        %482 = vmatpush2.bf16.msra.mxu0 0
        %483 = vmatprep.subr.bf16.mxu0 0
        %484 = vmatpush2.bf16.msra.mxu0 0
        %485 = vmatprep.subr.bf16.mxu0 0
        %486 = vmatpush2.bf16.msra.mxu0 0
        %487 = vmatprep.subr.bf16.mxu0 0
        %488 = vmatpush2.bf16.msra.mxu0 0
        %489 = vmatprep.subr.bf16.mxu0 0
        %490 = vmatpush2.bf16.msra.mxu0 0
        %491 = vmatprep.subr.bf16.mxu0 0
        %492 = vmatpush2.bf16.msra.mxu0 0
        %493 = vmatprep.mubr.bf16.mxu0 0
        %494 = vmatmul.mubr.bf16.gmra.mxu0 %v380
        %v495 = vpop.f32.mrf.mxu0
        %v496 = vadd.f32 %v411, %v495
        %v497 = vpop.f32.mrf.mxu0
        %v498 = vpop.f32.mrf.mxu0
        %v499 = vadd.f32 %v411, %v498
        %v500 = vpop.f32.mrf.mxu0
        %501 = vmatprep.mubr.bf16.mxu0 0
        %502 = vmatmul.mubr.bf16.gmra.mxu0 %v381
        %v503 = vpop.f32.mrf.mxu0
        %v504 = vadd.f32 %v411, %v503
        %v505 = vpop.f32.mrf.mxu0
        %v506 = vpop.f32.mrf.mxu0
        %v507 = vadd.f32 %v411, %v506
        %v508 = vpop.f32.mrf.mxu0
        %509 = vmatprep.mubr.bf16.mxu0 0
        %510 = vmatmul.mubr.bf16.gmra.mxu0 %v382
        %v511 = vpop.f32.mrf.mxu0
        %v512 = vadd.f32 %v411, %v511
        %v513 = vpop.f32.mrf.mxu0
        %v514 = vpop.f32.mrf.mxu0
        %v515 = vadd.f32 %v411, %v514
        %v516 = vpop.f32.mrf.mxu0
        %517 = vmatprep.mubr.bf16.mxu0 0
        %518 = vmatmul.mubr.bf16.gmra.mxu0 %v383
        %v519 = vpop.f32.mrf.mxu0
        %v520 = vadd.f32 %v411, %v519
        %v521 = vpop.f32.mrf.mxu0
        %v522 = vpop.f32.mrf.mxu0
        %v523 = vadd.f32 %v411, %v522
        %v524 = vpop.f32.mrf.mxu0
        %525 = vmatprep.mubr.bf16.mxu0 0
        %526 = vmatmul.mubr.bf16.gmra.mxu0 %v384
        %v527 = vpop.f32.mrf.mxu0
        %v528 = vadd.f32 %v411, %v527
        %v529 = vpop.f32.mrf.mxu0
        %v530 = vpop.f32.mrf.mxu0
        %v531 = vadd.f32 %v411, %v530
        %v532 = vpop.f32.mrf.mxu0
        %533 = vmatprep.mubr.bf16.mxu0 0
        %534 = vmatmul.mubr.bf16.gmra.mxu0 %v385
        %v535 = vpop.f32.mrf.mxu0
        %v536 = vadd.f32 %v411, %v535
        %v537 = vpop.f32.mrf.mxu0
        %v538 = vpop.f32.mrf.mxu0
        %v539 = vadd.f32 %v411, %v538
        %v540 = vpop.f32.mrf.mxu0
        %541 = vmatprep.mubr.bf16.mxu0 0
        %542 = vmatmul.mubr.bf16.gmra.mxu0 %v386
        %v543 = vpop.f32.mrf.mxu0
        %v544 = vadd.f32 %v411, %v543
        %v545 = vpop.f32.mrf.mxu0
        %v546 = vpop.f32.mrf.mxu0
        %v547 = vadd.f32 %v411, %v546
        %v548 = vpop.f32.mrf.mxu0
        %549 = vmatprep.mubr.bf16.mxu0 0
        %550 = vmatmul.mubr.bf16.gmra.mxu0 %v387
        %v551 = vpop.f32.mrf.mxu0
        %v552 = vadd.f32 %v411, %v551
        %v553 = vpop.f32.mrf.mxu0
        %v554 = vpop.f32.mrf.mxu0
        %v555 = vadd.f32 %v411, %v554
        %v556 = vpop.f32.mrf.mxu0
        %557 = vmatprep.mubr.bf16.mxu0 0
        %558 = vmatmul.mubr.bf16.gmra.mxu0 %v388
        %v559 = vpop.f32.mrf.mxu0
        %v560 = vadd.f32 %v411, %v559
        %v561 = vpop.f32.mrf.mxu0
        %v562 = vpop.f32.mrf.mxu0
        %v563 = vadd.f32 %v411, %v562
        %v564 = vpop.f32.mrf.mxu0
        %565 = vmatprep.mubr.bf16.mxu0 0
        %566 = vmatmul.mubr.bf16.gmra.mxu0 %v389
        %v567 = vpop.f32.mrf.mxu0
        %v568 = vadd.f32 %v411, %v567
        %v569 = vpop.f32.mrf.mxu0
        %v570 = vpop.f32.mrf.mxu0
        %v571 = vadd.f32 %v411, %v570
        %v572 = vpop.f32.mrf.mxu0
        %573 = vdwg.mxu0
        %v574 = vmax.f32 %v496, 0.0
        %v575 = vmax.f32 %v499, 0.0
        %v576 = vmax.f32 %v504, 0.0
        %v577 = vmax.f32 %v507, 0.0
        %v578 = vmax.f32 %v512, 0.0
        %v579 = vmax.f32 %v515, 0.0
        %v580 = vmax.f32 %v520, 0.0
        %v581 = vmax.f32 %v523, 0.0
        %v582 = vmax.f32 %v528, 0.0
        %v583 = vmax.f32 %v531, 0.0
        %v584 = vmax.f32 %v536, 0.0
        %v585 = vmax.f32 %v539, 0.0
        %v586 = vmax.f32 %v544, 0.0
        %v587 = vmax.f32 %v547, 0.0
        %v588 = vmax.f32 %v552, 0.0
        %v589 = vmax.f32 %v555, 0.0
        %v590 = vmax.f32 %v560, 0.0
        %v591 = vmax.f32 %v563, 0.0
        %v592 = vmax.f32 %v568, 0.0
        %v593 = vmax.f32 %v571, 0.0
        %v594 = vmin.f32 %v574, 6.0
        %v595 = vmin.f32 %v575, 6.0
        %v596 = vmin.f32 %v576, 6.0
        %v597 = vmin.f32 %v577, 6.0
        %v598 = vmin.f32 %v578, 6.0
        %v599 = vmin.f32 %v579, 6.0
        %v600 = vmin.f32 %v580, 6.0
        %v601 = vmin.f32 %v581, 6.0
        %v602 = vmin.f32 %v582, 6.0
        %v603 = vmin.f32 %v583, 6.0
        %v604 = vmin.f32 %v584, 6.0
        %v605 = vmin.f32 %v585, 6.0
        %v606 = vmin.f32 %v586, 6.0
        %v607 = vmin.f32 %v587, 6.0
        %v608 = vmin.f32 %v588, 6.0
        %v609 = vmin.f32 %v589, 6.0
        %v610 = vmin.f32 %v590, 6.0
        %v611 = vmin.f32 %v591, 6.0
        %v612 = vmin.f32 %v592, 6.0
        %v613 = vmin.f32 %v593, 6.0
        %v614 = vld [vmem:[#allocation7] sm:$0xff]
        %v615 = vld [vmem:[#allocation7 + $0x8] sm:$0x1]
        %v616 = vlaneseq
        %v617 = vshrl.u32 %v616, 7
        %v618 = vadd.s32 %v617, 8
        %vm619 = vcmp.gt.s32.totalorder %v617, 0
        %vm620 = vcmp.gt.s32.totalorder %v618, 0
        %v621 = vsel %vm619, 1, 0
        %v622 = vsel %vm620, 1, 0
        %v623 = vcvt.s32.f32 %v621
        %v624 = vcvt.s32.f32 %v622
        %vm625 = vcmp.lt.s32.totalorder %v617, 15
        %vm626 = vcmp.lt.s32.totalorder %v618, 15
        %v627 = vsel %vm625, 1, 0
        %v628 = vsel %vm626, 1, 0
        %v629 = vcvt.s32.f32 %v627
        %v630 = vcvt.s32.f32 %v628
        %v631 = vrot.slane %v594, 7
        %v632 = vrot.slane %v596, 7
        %v633 = vrot.slane %v598, 7
        %v634 = vrot.slane %v600, 7
        %v635 = vrot.slane %v602, 7
        %v636 = vrot.slane %v604, 7
        %v637 = vrot.slane %v606, 7
        %v638 = vrot.slane %v608, 7
        %v639 = vrot.slane %v595, 7
        %v640 = vrot.slane %v597, 7
        %v641 = vrot.slane %v599, 7
        %v642 = vrot.slane %v601, 7
        %v643 = vrot.slane %v603, 7
        %v644 = vrot.slane %v605, 7
        %v645 = vrot.slane %v607, 7
        %v646 = vrot.slane %v609, 7
        %vm647 = vcmp.lt.s32.totalorder %v617, 1
        %v648 = vsel %vm647, %v631, %v639
        %v649 = vsel %vm647, %v632, %v640
        %v650 = vsel %vm647, %v633, %v641
        %v651 = vsel %vm647, %v634, %v642
        %v652 = vsel %vm647, %v635, %v643
        %v653 = vsel %vm647, %v636, %v644
        %v654 = vsel %vm647, %v637, %v645
        %v655 = vsel %vm647, %v638, %v646
        %v656 = vsel %vm647, %v639, %v631
        %v657 = vsel %vm647, %v640, %v632
        %v658 = vsel %vm647, %v641, %v633
        %v659 = vsel %vm647, %v642, %v634
        %v660 = vsel %vm647, %v643, %v635
        %v661 = vsel %vm647, %v644, %v636
        %v662 = vsel %vm647, %v645, %v637
        %v663 = vsel %vm647, %v646, %v638
        %v664 = vmul.f32 %v656, %v623
        %v665 = vmul.f32 %v648, %v624
        %v666 = vmul.f32 %v657, %v623
        %v667 = vmul.f32 %v649, %v624
        %v668 = vmul.f32 %v658, %v623
        %v669 = vmul.f32 %v650, %v624
        %v670 = vmul.f32 %v659, %v623
        %v671 = vmul.f32 %v651, %v624
        %v672 = vmul.f32 %v660, %v623
        %v673 = vmul.f32 %v652, %v624
        %v674 = vmul.f32 %v661, %v623
        %v675 = vmul.f32 %v653, %v624
        %v676 = vmul.f32 %v662, %v623
        %v677 = vmul.f32 %v654, %v624
        %v678 = vmul.f32 %v663, %v623
        %v679 = vmul.f32 %v655, %v624
        %v680 = vrot.slane %v594, 1
        %v681 = vrot.slane %v596, 1
        %v682 = vrot.slane %v598, 1
        %v683 = vrot.slane %v600, 1
        %v684 = vrot.slane %v602, 1
        %v685 = vrot.slane %v604, 1
        %v686 = vrot.slane %v606, 1
        %v687 = vrot.slane %v608, 1
        %v688 = vrot.slane %v595, 1
        %v689 = vrot.slane %v597, 1
        %v690 = vrot.slane %v599, 1
        %v691 = vrot.slane %v601, 1
        %v692 = vrot.slane %v603, 1
        %v693 = vrot.slane %v605, 1
        %v694 = vrot.slane %v607, 1
        %v695 = vrot.slane %v609, 1
        %vm696 = vcmp.lt.s32.totalorder %v617, 7
        %v697 = vsel %vm696, %v680, %v688
        %v698 = vsel %vm696, %v681, %v689
        %v699 = vsel %vm696, %v682, %v690
        %v700 = vsel %vm696, %v683, %v691
        %v701 = vsel %vm696, %v684, %v692
        %v702 = vsel %vm696, %v685, %v693
        %v703 = vsel %vm696, %v686, %v694
        %v704 = vsel %vm696, %v687, %v695
        %v705 = vsel %vm696, %v688, %v680
        %v706 = vsel %vm696, %v689, %v681
        %v707 = vsel %vm696, %v690, %v682
        %v708 = vsel %vm696, %v691, %v683
        %v709 = vsel %vm696, %v692, %v684
        %v710 = vsel %vm696, %v693, %v685
        %v711 = vsel %vm696, %v694, %v686
        %v712 = vsel %vm696, %v695, %v687
        %v713 = vmul.f32 %v697, %v629
        %v714 = vmul.f32 %v705, %v630
        %v715 = vmul.f32 %v698, %v629
        %v716 = vmul.f32 %v706, %v630
        %v717 = vmul.f32 %v699, %v629
        %v718 = vmul.f32 %v707, %v630
        %v719 = vmul.f32 %v700, %v629
        %v720 = vmul.f32 %v708, %v630
        %v721 = vmul.f32 %v701, %v629
        %v722 = vmul.f32 %v709, %v630
        %v723 = vmul.f32 %v702, %v629
        %v724 = vmul.f32 %v710, %v630
        %v725 = vmul.f32 %v703, %v629
        %v726 = vmul.f32 %v711, %v630
        %v727 = vmul.f32 %v704, %v629
        %v728 = vmul.f32 %v712, %v630
        %v729 = vlaneseq
        %v730 = vshrl.u32 %v729, 7
        %v731 = vsub.s32 0, %v730
        %v732 = vrot.slane %v614, %v731
        %v733 = vmul.f32 %v664, %v732
        %v734 = vmul.f32 %v665, %v732
        %v735 = vmul.f32 %v666, %v732
        %v736 = vmul.f32 %v667, %v732
        %v737 = vmul.f32 %v668, %v732
        %v738 = vmul.f32 %v669, %v732
        %v739 = vmul.f32 %v670, %v732
        %v740 = vmul.f32 %v671, %v732
        %v741 = vmul.f32 %v672, %v732
        %v742 = vmul.f32 %v673, %v732
        %v743 = vmul.f32 %v674, %v732
        %v744 = vmul.f32 %v675, %v732
        %v745 = vmul.f32 %v676, %v732
        %v746 = vmul.f32 %v677, %v732
        %v747 = vmul.f32 %v678, %v732
        %v748 = vmul.f32 %v679, %v732
        %v749 = vlaneseq
        %v750 = vshrl.u32 %v749, 7
        %v751 = vsub.s32 1, %v750
        %v752 = vrot.slane %v614, %v751
        %v753 = vmul.f32 %v594, %v752
        %v754 = vmul.f32 %v595, %v752
        %v755 = vmul.f32 %v596, %v752
        %v756 = vmul.f32 %v597, %v752
        %v757 = vmul.f32 %v598, %v752
        %v758 = vmul.f32 %v599, %v752
        %v759 = vmul.f32 %v600, %v752
        %v760 = vmul.f32 %v601, %v752
        %v761 = vmul.f32 %v602, %v752
        %v762 = vmul.f32 %v603, %v752
        %v763 = vmul.f32 %v604, %v752
        %v764 = vmul.f32 %v605, %v752
        %v765 = vmul.f32 %v606, %v752
        %v766 = vmul.f32 %v607, %v752
        %v767 = vmul.f32 %v608, %v752
        %v768 = vmul.f32 %v609, %v752
        %v769 = vadd.f32 %v733, %v753
        %v770 = vadd.f32 %v734, %v754
        %v771 = vadd.f32 %v735, %v755
        %v772 = vadd.f32 %v736, %v756
        %v773 = vadd.f32 %v737, %v757
        %v774 = vadd.f32 %v738, %v758
        %v775 = vadd.f32 %v739, %v759
        %v776 = vadd.f32 %v740, %v760
        %v777 = vadd.f32 %v741, %v761
        %v778 = vadd.f32 %v742, %v762
        %v779 = vadd.f32 %v743, %v763
        %v780 = vadd.f32 %v744, %v764
        %v781 = vadd.f32 %v745, %v765
        %v782 = vadd.f32 %v746, %v766
        %v783 = vadd.f32 %v747, %v767
        %v784 = vadd.f32 %v748, %v768
        %v785 = vlaneseq
        %v786 = vshrl.u32 %v785, 7
        %v787 = vsub.s32 2, %v786
        %v788 = vrot.slane %v614, %v787
        %v789 = vmul.f32 %v713, %v788
        %v790 = vmul.f32 %v714, %v788
        %v791 = vmul.f32 %v715, %v788
        %v792 = vmul.f32 %v716, %v788
        %v793 = vmul.f32 %v717, %v788
        %v794 = vmul.f32 %v718, %v788
        %v795 = vmul.f32 %v719, %v788
        %v796 = vmul.f32 %v720, %v788
        %v797 = vmul.f32 %v721, %v788
        %v798 = vmul.f32 %v722, %v788
        %v799 = vmul.f32 %v723, %v788
        %v800 = vmul.f32 %v724, %v788
        %v801 = vmul.f32 %v725, %v788
        %v802 = vmul.f32 %v726, %v788
        %v803 = vmul.f32 %v727, %v788
        %v804 = vmul.f32 %v728, %v788
        %v805 = vadd.f32 %v769, %v789
        %v806 = vadd.f32 %v770, %v790
        %v807 = vadd.f32 %v771, %v791
        %v808 = vadd.f32 %v772, %v792
        %v809 = vadd.f32 %v773, %v793
        %v810 = vadd.f32 %v774, %v794
        %v811 = vadd.f32 %v775, %v795
        %v812 = vadd.f32 %v776, %v796
        %v813 = vadd.f32 %v777, %v797
        %v814 = vadd.f32 %v778, %v798
        %v815 = vadd.f32 %v779, %v799
        %v816 = vadd.f32 %v780, %v800
        %v817 = vadd.f32 %v781, %v801
        %v818 = vadd.f32 %v782, %v802
        %v819 = vadd.f32 %v783, %v803
        %v820 = vadd.f32 %v784, %v804
        %v821 = vrot.slane %v610, 7
        %v822 = vrot.slane %v611, 7
        %v823 = vsel %vm647, %v821, %v822
        %v824 = vsel %vm647, %v822, %v821
        %v825 = vmul.f32 %v824, %v623
        %v826 = vmul.f32 %v823, %v624
        %v827 = vrot.slane %v610, 1
        %v828 = vrot.slane %v611, 1
        %v829 = vsel %vm696, %v827, %v828
        %v830 = vsel %vm696, %v828, %v827
        %v831 = vmul.f32 %v829, %v629
        %v832 = vmul.f32 %v830, %v630
        %v833 = vlaneseq
        %v834 = vshrl.u32 %v833, 7
        %v835 = vsub.s32 3, %v834
        %v836 = vrot.slane %v614, %v835
        %v837 = vmul.f32 %v666, %v836
        %v838 = vmul.f32 %v667, %v836
        %v839 = vmul.f32 %v668, %v836
        %v840 = vmul.f32 %v669, %v836
        %v841 = vmul.f32 %v670, %v836
        %v842 = vmul.f32 %v671, %v836
        %v843 = vmul.f32 %v672, %v836
        %v844 = vmul.f32 %v673, %v836
        %v845 = vmul.f32 %v674, %v836
        %v846 = vmul.f32 %v675, %v836
        %v847 = vmul.f32 %v676, %v836
        %v848 = vmul.f32 %v677, %v836
        %v849 = vmul.f32 %v678, %v836
        %v850 = vmul.f32 %v679, %v836
        %v851 = vmul.f32 %v825, %v836
        %v852 = vmul.f32 %v826, %v836
        %v853 = vlaneseq
        %v854 = vshrl.u32 %v853, 7
        %v855 = vsub.s32 4, %v854
        %v856 = vrot.slane %v614, %v855
        %v857 = vmul.f32 %v596, %v856
        %v858 = vmul.f32 %v597, %v856
        %v859 = vmul.f32 %v598, %v856
        %v860 = vmul.f32 %v599, %v856
        %v861 = vmul.f32 %v600, %v856
        %v862 = vmul.f32 %v601, %v856
        %v863 = vmul.f32 %v602, %v856
        %v864 = vmul.f32 %v603, %v856
        %v865 = vmul.f32 %v604, %v856
        %v866 = vmul.f32 %v605, %v856
        %v867 = vmul.f32 %v606, %v856
        %v868 = vmul.f32 %v607, %v856
        %v869 = vmul.f32 %v608, %v856
        %v870 = vmul.f32 %v609, %v856
        %v871 = vmul.f32 %v610, %v856
        %v872 = vmul.f32 %v611, %v856
        %v873 = vadd.f32 %v837, %v857
        %v874 = vadd.f32 %v838, %v858
        %v875 = vadd.f32 %v839, %v859
        %v876 = vadd.f32 %v840, %v860
        %v877 = vadd.f32 %v841, %v861
        %v878 = vadd.f32 %v842, %v862
        %v879 = vadd.f32 %v843, %v863
        %v880 = vadd.f32 %v844, %v864
        %v881 = vadd.f32 %v845, %v865
        %v882 = vadd.f32 %v846, %v866
        %v883 = vadd.f32 %v847, %v867
        %v884 = vadd.f32 %v848, %v868
        %v885 = vadd.f32 %v849, %v869
        %v886 = vadd.f32 %v850, %v870
        %v887 = vadd.f32 %v851, %v871
        %v888 = vadd.f32 %v852, %v872
        %v889 = vlaneseq
        %v890 = vshrl.u32 %v889, 7
        %v891 = vsub.s32 5, %v890
        %v892 = vrot.slane %v614, %v891
        %v893 = vmul.f32 %v715, %v892
        %v894 = vmul.f32 %v716, %v892
        %v895 = vmul.f32 %v717, %v892
        %v896 = vmul.f32 %v718, %v892
        %v897 = vmul.f32 %v719, %v892
        %v898 = vmul.f32 %v720, %v892
        %v899 = vmul.f32 %v721, %v892
        %v900 = vmul.f32 %v722, %v892
        %v901 = vmul.f32 %v723, %v892
        %v902 = vmul.f32 %v724, %v892
        %v903 = vmul.f32 %v725, %v892
        %v904 = vmul.f32 %v726, %v892
        %v905 = vmul.f32 %v727, %v892
        %v906 = vmul.f32 %v728, %v892
        %v907 = vmul.f32 %v831, %v892
        %v908 = vmul.f32 %v832, %v892
        %v909 = vadd.f32 %v873, %v893
        %v910 = vadd.f32 %v874, %v894
        %v911 = vadd.f32 %v875, %v895
        %v912 = vadd.f32 %v876, %v896
        %v913 = vadd.f32 %v877, %v897
        %v914 = vadd.f32 %v878, %v898
        %v915 = vadd.f32 %v879, %v899
        %v916 = vadd.f32 %v880, %v900
        %v917 = vadd.f32 %v881, %v901
        %v918 = vadd.f32 %v882, %v902
        %v919 = vadd.f32 %v883, %v903
        %v920 = vadd.f32 %v884, %v904
        %v921 = vadd.f32 %v885, %v905
        %v922 = vadd.f32 %v886, %v906
        %v923 = vadd.f32 %v887, %v907
        %v924 = vadd.f32 %v888, %v908
        %v925 = vadd.f32 %v805, %v909
        %v926 = vadd.f32 %v806, %v910
        %v927 = vadd.f32 %v807, %v911
        %v928 = vadd.f32 %v808, %v912
        %v929 = vadd.f32 %v809, %v913
        %v930 = vadd.f32 %v810, %v914
        %v931 = vadd.f32 %v811, %v915
        %v932 = vadd.f32 %v812, %v916
        %v933 = vadd.f32 %v813, %v917
        %v934 = vadd.f32 %v814, %v918
        %v935 = vadd.f32 %v815, %v919
        %v936 = vadd.f32 %v816, %v920
        %v937 = vadd.f32 %v817, %v921
        %v938 = vadd.f32 %v818, %v922
        %v939 = vadd.f32 %v819, %v923
        %v940 = vadd.f32 %v820, %v924
        %v941 = vrot.slane %v612, 7
        %v942 = vrot.slane %v613, 7
        %v943 = vsel %vm647, %v941, %v942
        %v944 = vsel %vm647, %v942, %v941
        %v945 = vmul.f32 %v944, %v623
        %v946 = vmul.f32 %v943, %v624
        %v947 = vrot.slane %v612, 1
        %v948 = vrot.slane %v613, 1
        %v949 = vsel %vm696, %v947, %v948
        %v950 = vsel %vm696, %v948, %v947
        %v951 = vmul.f32 %v949, %v629
        %v952 = vmul.f32 %v950, %v630
        %v953 = vlaneseq
        %v954 = vshrl.u32 %v953, 7
        %v955 = vsub.s32 6, %v954
        %v956 = vrot.slane %v614, %v955
        %v957 = vmul.f32 %v668, %v956
        %v958 = vmul.f32 %v669, %v956
        %v959 = vmul.f32 %v670, %v956
        %v960 = vmul.f32 %v671, %v956
        %v961 = vmul.f32 %v672, %v956
        %v962 = vmul.f32 %v673, %v956
        %v963 = vmul.f32 %v674, %v956
        %v964 = vmul.f32 %v675, %v956
        %v965 = vmul.f32 %v676, %v956
        %v966 = vmul.f32 %v677, %v956
        %v967 = vmul.f32 %v678, %v956
        %v968 = vmul.f32 %v679, %v956
        %v969 = vmul.f32 %v825, %v956
        %v970 = vmul.f32 %v826, %v956
        %v971 = vmul.f32 %v945, %v956
        %v972 = vmul.f32 %v946, %v956
        %v973 = vlaneseq
        %v974 = vshrl.u32 %v973, 7
        %v975 = vsub.s32 7, %v974
        %v976 = vrot.slane %v614, %v975
        %v977 = vmul.f32 %v598, %v976
        %v978 = vmul.f32 %v599, %v976
        %v979 = vmul.f32 %v600, %v976
        %v980 = vmul.f32 %v601, %v976
        %v981 = vmul.f32 %v602, %v976
        %v982 = vmul.f32 %v603, %v976
        %v983 = vmul.f32 %v604, %v976
        %v984 = vmul.f32 %v605, %v976
        %v985 = vmul.f32 %v606, %v976
        %v986 = vmul.f32 %v607, %v976
        %v987 = vmul.f32 %v608, %v976
        %v988 = vmul.f32 %v609, %v976
        %v989 = vmul.f32 %v610, %v976
        %v990 = vmul.f32 %v611, %v976
        %v991 = vmul.f32 %v612, %v976
        %v992 = vmul.f32 %v613, %v976
        %v993 = vadd.f32 %v957, %v977
        %v994 = vadd.f32 %v958, %v978
        %v995 = vadd.f32 %v959, %v979
        %v996 = vadd.f32 %v960, %v980
        %v997 = vadd.f32 %v961, %v981
        %v998 = vadd.f32 %v962, %v982
        %v999 = vadd.f32 %v963, %v983
        %v1000 = vadd.f32 %v964, %v984
        %v1001 = vadd.f32 %v965, %v985
        %v1002 = vadd.f32 %v966, %v986
        %v1003 = vadd.f32 %v967, %v987
        %v1004 = vadd.f32 %v968, %v988
        %v1005 = vadd.f32 %v969, %v989
        %v1006 = vadd.f32 %v970, %v990
        %v1007 = vadd.f32 %v971, %v991
        %v1008 = vadd.f32 %v972, %v992
        %v1009 = vlaneseq
        %v1010 = vshrl.u32 %v1009, 7
        %v1011 = vsub.s32 0, %v1010
        %v1012 = vrot.slane %v615, %v1011
        %v1013 = vmul.f32 %v717, %v1012
        %v1014 = vmul.f32 %v718, %v1012
        %v1015 = vmul.f32 %v719, %v1012
        %v1016 = vmul.f32 %v720, %v1012
        %v1017 = vmul.f32 %v721, %v1012
        %v1018 = vmul.f32 %v722, %v1012
        %v1019 = vmul.f32 %v723, %v1012
        %v1020 = vmul.f32 %v724, %v1012
        %v1021 = vmul.f32 %v725, %v1012
        %v1022 = vmul.f32 %v726, %v1012
        %v1023 = vmul.f32 %v727, %v1012
        %v1024 = vmul.f32 %v728, %v1012
        %v1025 = vmul.f32 %v831, %v1012
        %v1026 = vmul.f32 %v832, %v1012
        %v1027 = vmul.f32 %v951, %v1012
        %v1028 = vmul.f32 %v952, %v1012
        %v1029 = vadd.f32 %v993, %v1013
        %v1030 = vadd.f32 %v994, %v1014
        %v1031 = vadd.f32 %v995, %v1015
        %v1032 = vadd.f32 %v996, %v1016
        %v1033 = vadd.f32 %v997, %v1017
        %v1034 = vadd.f32 %v998, %v1018
        %v1035 = vadd.f32 %v999, %v1019
        %v1036 = vadd.f32 %v1000, %v1020
        %v1037 = vadd.f32 %v1001, %v1021
        %v1038 = vadd.f32 %v1002, %v1022
        %v1039 = vadd.f32 %v1003, %v1023
        %v1040 = vadd.f32 %v1004, %v1024
        %v1041 = vadd.f32 %v1005, %v1025
        %v1042 = vadd.f32 %v1006, %v1026
        %v1043 = vadd.f32 %v1007, %v1027
        %v1044 = vadd.f32 %v1008, %v1028
        %v1045 = vadd.f32 %v925, %v1029
        %v1046 = vadd.f32 %v926, %v1030
        %v1047 = vadd.f32 %v927, %v1031
        %v1048 = vadd.f32 %v928, %v1032
        %v1049 = vadd.f32 %v929, %v1033
        %v1050 = vadd.f32 %v930, %v1034
        %v1051 = vadd.f32 %v931, %v1035
        %v1052 = vadd.f32 %v932, %v1036
        %v1053 = vadd.f32 %v933, %v1037
        %v1054 = vadd.f32 %v934, %v1038
        %v1055 = vadd.f32 %v935, %v1039
        %v1056 = vadd.f32 %v936, %v1040
        %v1057 = vadd.f32 %v937, %v1041
        %v1058 = vadd.f32 %v938, %v1042
        %v1059 = vadd.f32 %v939, %v1043
        %v1060 = vadd.f32 %v940, %v1044
        %v1061 = vld [vmem:[%s4] sm:$0x1]
        %v1063 = vlaneseq
        %v1064 = vshrl.u32 %v1063, 7
        %v1065 = vsub.s32 0, %v1064
        %v1066 = vrot.slane %v1061, %v1065
        %v1068 = vadd.f32 %v1045, %v1066
        %v1069 = vadd.f32 %v1046, %v1066
        %v1070 = vadd.f32 %v1047, %v1066
        %v1071 = vadd.f32 %v1048, %v1066
        %v1072 = vadd.f32 %v1049, %v1066
        %v1073 = vadd.f32 %v1050, %v1066
        %v1074 = vadd.f32 %v1051, %v1066
        %v1075 = vadd.f32 %v1052, %v1066
        %v1076 = vadd.f32 %v1053, %v1066
        %v1077 = vadd.f32 %v1054, %v1066
        %v1078 = vadd.f32 %v1055, %v1066
        %v1079 = vadd.f32 %v1056, %v1066
        %v1080 = vadd.f32 %v1057, %v1066
        %v1081 = vadd.f32 %v1058, %v1066
        %v1082 = vadd.f32 %v1059, %v1066
        %v1083 = vadd.f32 %v1060, %v1066
        %v1084 = vmax.f32 %v1068, 0.0
        %v1085 = vmax.f32 %v1069, 0.0
        %v1086 = vmax.f32 %v1070, 0.0
        %v1087 = vmax.f32 %v1071, 0.0
        %v1088 = vmax.f32 %v1072, 0.0
        %v1089 = vmax.f32 %v1073, 0.0
        %v1090 = vmax.f32 %v1074, 0.0
        %v1091 = vmax.f32 %v1075, 0.0
        %v1092 = vmax.f32 %v1076, 0.0
        %v1093 = vmax.f32 %v1077, 0.0
        %v1094 = vmax.f32 %v1078, 0.0
        %v1095 = vmax.f32 %v1079, 0.0
        %v1096 = vmax.f32 %v1080, 0.0
        %v1097 = vmax.f32 %v1081, 0.0
        %v1098 = vmax.f32 %v1082, 0.0
        %v1099 = vmax.f32 %v1083, 0.0
        %v1100 = vmin.f32 %v1084, 6.0
        %v1101 = vmin.f32 %v1085, 6.0
        %v1102 = vmin.f32 %v1086, 6.0
        %v1103 = vmin.f32 %v1087, 6.0
        %v1104 = vmin.f32 %v1088, 6.0
        %v1105 = vmin.f32 %v1089, 6.0
        %v1106 = vmin.f32 %v1090, 6.0
        %v1107 = vmin.f32 %v1091, 6.0
        %v1108 = vmin.f32 %v1092, 6.0
        %v1109 = vmin.f32 %v1093, 6.0
        %v1110 = vmin.f32 %v1094, 6.0
        %v1111 = vmin.f32 %v1095, 6.0
        %v1112 = vmin.f32 %v1096, 6.0
        %v1113 = vmin.f32 %v1097, 6.0
        %v1114 = vmin.f32 %v1098, 6.0
        %v1115 = vmin.f32 %v1099, 6.0
        %v1116 = vpack.c.bf16 %v1101, %v1100
        %v1117 = vpack.c.bf16 %v1103, %v1102
        %v1118 = vpack.c.bf16 %v1105, %v1104
        %v1119 = vpack.c.bf16 %v1107, %v1106
        %v1120 = vpack.c.bf16 %v1109, %v1108
        %v1121 = vpack.c.bf16 %v1111, %v1110
        %v1122 = vpack.c.bf16 %v1113, %v1112
        %v1123 = vpack.c.bf16 %v1115, %v1114
        %v1124 = vld [vmem:[#allocation8] sm:$0xf]
        %v1125 = vld [vmem:[#allocation8 + $0x4] sm:$0xf]
        %v1126 = vld [vmem:[#allocation8 + $0x8] sm:$0xf]
        %v1127 = vld [vmem:[#allocation8 + $0xc] sm:$0xf]
        %v1128 = vld [vmem:[#allocation8 + $0x10] sm:$0xf]
        %v1129 = vld [vmem:[#allocation8 + $0x14] sm:$0xf]
        %v1130 = vld [vmem:[#allocation8 + $0x18] sm:$0xf]
        %v1131 = vld [vmem:[#allocation8 + $0x1c] sm:$0xf]
        %v1132 = vld [vmem:[#allocation8 + $0x20] sm:$0xf]
        %v1133 = vld [vmem:[#allocation8 + $0x24] sm:$0xf]
        %v1134 = vld [vmem:[#allocation8 + $0x28] sm:$0xf]
        %v1135 = vld [vmem:[#allocation8 + $0x2c] sm:$0xf]
        %v1136 = vld [vmem:[#allocation8 + $0x30] sm:$0xf]
        %v1137 = vld [vmem:[#allocation8 + $0x34] sm:$0xf]
        %v1138 = vld [vmem:[#allocation8 + $0x38] sm:$0xf]
        %v1139 = vld [vmem:[#allocation8 + $0x3c] sm:$0xf]
        %v1140 = vld [vmem:[%s6] sm:$0x1]
        %v1142 = vlaneseq
        %v1143 = vshrl.u32 %v1142, 7
        %v1144 = vsub.s32 0, %v1143
        %v1145 = vrot.slane %v1140, %v1144
        %v1163 = vunpack.c.l.b16 %v1124
        %v1164 = vunpack.c.l.b16 %v1125
        %v1165 = vunpack.c.l.b16 %v1126
        %v1166 = vunpack.c.l.b16 %v1127
        %v1167 = vunpack.c.l.b16 %v1128
        %v1168 = vunpack.c.l.b16 %v1129
        %v1169 = vunpack.c.l.b16 %v1130
        %v1170 = vunpack.c.l.b16 %v1131
        %v1171 = vunpack.c.l.b16 %v1132
        %v1172 = vunpack.c.l.b16 %v1133
        %v1173 = vunpack.c.l.b16 %v1134
        %v1174 = vunpack.c.l.b16 %v1135
        %v1175 = vunpack.c.l.b16 %v1136
        %v1176 = vunpack.c.l.b16 %v1137
        %v1177 = vunpack.c.l.b16 %v1138
        %v1178 = vunpack.c.l.b16 %v1139
        %v1179 = vpack.c.b16 %v1164, %v1163
        %v1180 = vpack.c.b16 %v1166, %v1165
        %v1181 = vpack.c.b16 %v1168, %v1167
        %v1182 = vpack.c.b16 %v1170, %v1169
        %v1183 = vpack.c.b16 %v1172, %v1171
        %v1184 = vpack.c.b16 %v1174, %v1173
        %v1185 = vpack.c.b16 %v1176, %v1175
        %v1186 = vpack.c.b16 %v1178, %v1177
        %1195 = vmatprep.subr.bf16.mxu0 0
        %1196 = vmatpush1.bf16.msra.mxu0 %v1186
        %1197 = vmatprep.subr.bf16.mxu0 0
        %1198 = vmatpush1.bf16.msra.mxu0 %v1185
        %1199 = vmatprep.subr.bf16.mxu0 0
        %1200 = vmatpush1.bf16.msra.mxu0 %v1184
        %1201 = vmatprep.subr.bf16.mxu0 0
        %1202 = vmatpush1.bf16.msra.mxu0 %v1183
        %1203 = vmatprep.subr.bf16.mxu0 0
        %1204 = vmatpush1.bf16.msra.mxu0 %v1182
        %1205 = vmatprep.subr.bf16.mxu0 0
        %1206 = vmatpush1.bf16.msra.mxu0 %v1181
        %1207 = vmatprep.subr.bf16.mxu0 0
        %1208 = vmatpush1.bf16.msra.mxu0 %v1180
        %1209 = vmatprep.subr.bf16.mxu0 0
        %1210 = vmatpush1.bf16.msra.mxu0 %v1179
        %1211 = vmatprep.subr.bf16.mxu0 0
        %1212 = vmatpush2.bf16.msra.mxu0 0
        %1213 = vmatprep.subr.bf16.mxu0 0
        %1214 = vmatpush2.bf16.msra.mxu0 0
        %1215 = vmatprep.subr.bf16.mxu0 0
        %1216 = vmatpush2.bf16.msra.mxu0 0
        %1217 = vmatprep.subr.bf16.mxu0 0
        %1218 = vmatpush2.bf16.msra.mxu0 0
        %1219 = vmatprep.subr.bf16.mxu0 0
        %1220 = vmatpush2.bf16.msra.mxu0 0
        %1221 = vmatprep.subr.bf16.mxu0 0
        %1222 = vmatpush2.bf16.msra.mxu0 0
        %1223 = vmatprep.subr.bf16.mxu0 0
        %1224 = vmatpush2.bf16.msra.mxu0 0
        %1225 = vmatprep.subr.bf16.mxu0 0
        %1226 = vmatpush2.bf16.msra.mxu0 0
        %1227 = vmatprep.mubr.bf16.mxu0 0
        %1228 = vmatmul.mubr.bf16.gmra.mxu0 %v1116
        %v1229 = vpop.f32.mrf.mxu0
        %v1230 = vadd.f32 %v1145, %v1229
        %v1231 = vpop.f32.mrf.mxu0
        %v1232 = vpop.f32.mrf.mxu0
        %v1233 = vadd.f32 %v1145, %v1232
        %v1234 = vpop.f32.mrf.mxu0
        %1235 = vmatprep.mubr.bf16.mxu0 0
        %1236 = vmatmul.mubr.bf16.gmra.mxu0 %v1117
        %v1237 = vpop.f32.mrf.mxu0
        %v1238 = vadd.f32 %v1145, %v1237
        %v1239 = vpop.f32.mrf.mxu0
        %v1240 = vpop.f32.mrf.mxu0
        %v1241 = vadd.f32 %v1145, %v1240
        %v1242 = vpop.f32.mrf.mxu0
        %1243 = vmatprep.mubr.bf16.mxu0 0
        %1244 = vmatmul.mubr.bf16.gmra.mxu0 %v1118
        %v1245 = vpop.f32.mrf.mxu0
        %v1246 = vadd.f32 %v1145, %v1245
        %v1247 = vpop.f32.mrf.mxu0
        %v1248 = vpop.f32.mrf.mxu0
        %v1249 = vadd.f32 %v1145, %v1248
        %v1250 = vpop.f32.mrf.mxu0
        %1251 = vmatprep.mubr.bf16.mxu0 0
        %1252 = vmatmul.mubr.bf16.gmra.mxu0 %v1119
        %v1253 = vpop.f32.mrf.mxu0
        %v1254 = vadd.f32 %v1145, %v1253
        %v1255 = vpop.f32.mrf.mxu0
        %v1256 = vpop.f32.mrf.mxu0
        %v1257 = vadd.f32 %v1145, %v1256
        %v1258 = vpop.f32.mrf.mxu0
        %1259 = vmatprep.mubr.bf16.mxu0 0
        %1260 = vmatmul.mubr.bf16.gmra.mxu0 %v1120
        %v1261 = vpop.f32.mrf.mxu0
        %v1262 = vadd.f32 %v1145, %v1261
        %v1263 = vpop.f32.mrf.mxu0
        %v1264 = vpop.f32.mrf.mxu0
        %v1265 = vadd.f32 %v1145, %v1264
        %v1266 = vpop.f32.mrf.mxu0
        %1267 = vmatprep.mubr.bf16.mxu0 0
        %1268 = vmatmul.mubr.bf16.gmra.mxu0 %v1121
        %v1269 = vpop.f32.mrf.mxu0
        %v1270 = vadd.f32 %v1145, %v1269
        %v1271 = vpop.f32.mrf.mxu0
        %v1272 = vpop.f32.mrf.mxu0
        %v1273 = vadd.f32 %v1145, %v1272
        %v1274 = vpop.f32.mrf.mxu0
        %1275 = vmatprep.mubr.bf16.mxu0 0
        %1276 = vmatmul.mubr.bf16.gmra.mxu0 %v1122
        %v1277 = vpop.f32.mrf.mxu0
        %v1278 = vadd.f32 %v1145, %v1277
        %v1279 = vpop.f32.mrf.mxu0
        %v1280 = vpop.f32.mrf.mxu0
        %v1281 = vadd.f32 %v1145, %v1280
        %v1282 = vpop.f32.mrf.mxu0
        %1283 = vmatprep.mubr.bf16.mxu0 0
        %1284 = vmatmul.mubr.bf16.gmra.mxu0 %v1123
        %v1285 = vpop.f32.mrf.mxu0
        %v1286 = vadd.f32 %v1145, %v1285
        %v1287 = vpop.f32.mrf.mxu0
        %v1288 = vpop.f32.mrf.mxu0
        %v1289 = vadd.f32 %v1145, %v1288
        %v1290 = vpop.f32.mrf.mxu0
        %1291 = vdwg.mxu0
        %v1292 = vadd.f32 %v1230, %v362
        %v1293 = vadd.f32 %v1233, %v363
        %v1294 = vadd.f32 %v1238, %v364
        %v1295 = vadd.f32 %v1241, %v365
        %v1296 = vadd.f32 %v1246, %v366
        %v1297 = vadd.f32 %v1249, %v367
        %v1298 = vadd.f32 %v1254, %v368
        %v1299 = vadd.f32 %v1257, %v369
        %v1300 = vadd.f32 %v1262, %v370
        %v1301 = vadd.f32 %v1265, %v371
        %v1302 = vadd.f32 %v1270, %v372
        %v1303 = vadd.f32 %v1273, %v373
        %v1304 = vadd.f32 %v1278, %v374
        %v1305 = vadd.f32 %v1281, %v375
        %v1306 = vadd.f32 %v1286, %v376
        %v1307 = vadd.f32 %v1289, %v377
        %1308 = vst [vmem:[%s354] sm:$0xff] %v1292
        %1309 = vst [vmem:[%s354 + $0x8] sm:$0xff] %v1293
        %1310 = vst [vmem:[%s354 + $0x10] sm:$0xff] %v1294
        %1311 = vst [vmem:[%s354 + $0x18] sm:$0xff] %v1295
        %1312 = vst [vmem:[%s354 + $0x20] sm:$0xff] %v1296
        %1313 = vst [vmem:[%s354 + $0x28] sm:$0xff] %v1297
        %1314 = vst [vmem:[%s354 + $0x30] sm:$0xff] %v1298
        %1315 = vst [vmem:[%s354 + $0x38] sm:$0xff] %v1299
        %1316 = vst [vmem:[%s354 + $0x40] sm:$0xff] %v1300
        %1317 = vst [vmem:[%s354 + $0x48] sm:$0xff] %v1301
        %1318 = vst [vmem:[%s354 + $0x50] sm:$0xff] %v1302
        %1319 = vst [vmem:[%s354 + $0x58] sm:$0xff] %v1303
        %1320 = vst [vmem:[%s354 + $0x60] sm:$0xff] %v1304
        %1321 = vst [vmem:[%s354 + $0x68] sm:$0xff] %v1305
        %1322 = vst [vmem:[%s354 + $0x70] sm:$0xff] %v1306
        %1323 = vst [vmem:[%s354 + $0x78] sm:$0xff] %v1307
        %s1324 = sand.u32 %s200, 1
        %s1325 = scalar_lea.sflag [#allocation4], %s1324
        %s1326 = sand.u32 %s200, 1
        %s1327 = smul.addr %s1326, 128
        %s1328 = scalar_lea.vmem [#allocation10], %s1327
        // Predicated region
        $region65: #{tpu_custom_call.1} parent=47 // pred_check
          %p1329 = pneg %p210
        $region66: #{tpu_custom_call.1} parent=47 // pred_check_branch
          %1331 = sbr.rel (%p1329) target = $region68
        $region67: #{tpu_custom_call.1} parent=47 // pred_region
          %s1332 = smul.u32 8, %s31
          %s1334 = ssub.s32 2048, 2048
          %1335 = vsyncadd %s1325, %s1334
          %s1336 = smul.addr %s1332, 2
          %s1337 = smul.addr %s30, 32
          %s1338 = sadd.s32 %s1336, %s1337
          %s1339 = smul.addr %s1338, 128
          %s1340 = scalar_lea.hbm %s7, %s1339
          %s1341 = sshll.u32 %s1328, 4
          %s1342 = int_to_ptr.vmem [resolvable:$true] %s1341
          %1347 = dma.vmem_to_hbm [thread:$0]  %s1342, 2048, %s1340, %s1325, 128, 128, 8
        $region68: #{tpu_custom_call.1} parent=47 // pred_fallthru
          _
      $region48: #{tpu_custom_call.1} parent=5 // pred_fallthru
        _
      %p1348 = scmp.le.s32.totalorder 2, %s21
      // Predicated region
      $region69: #{tpu_custom_call.1} parent=5 // pred_check
        %p1349 = pneg %p1348
      $region70: #{tpu_custom_call.1} parent=5 // pred_check_branch
        %1351 = sbr.rel (%p1349) target = $region72
      $region71: #{tpu_custom_call.1} parent=5 // pred_region
        %s1352 = ssub.s32 %s21, 2
        // Predicated region
        $region73: #{tpu_custom_call.1} parent=71 // pred_check
          %p1353 = pneg %p216
        $region74: #{tpu_custom_call.1} parent=71 // pred_check_branch
          %1355 = sbr.rel (%p1353) target = $region76
        $region75: #{tpu_custom_call.1} parent=71 // pred_region
          %s1356 = sand.u32 %s201, 1
          %s1357 = scalar_lea.sflag [#allocation4], %s1356
          %s1358 = sand.u32 %s201, 1
          %s1359 = smul.addr %s1358, 128
          %s1360 = scalar_lea.vmem [#allocation10], %s1359
          %1361 = dma.done %s1357, 2048
        $region76: #{tpu_custom_call.1} parent=71 // pred_fallthru
          _
      $region72: #{tpu_custom_call.1} parent=5 // pred_fallthru
        _
    $region6: #{tpu_custom_call.1} parent=1 // loop_footer
      %s25 = sadd.s32 1, %s21
    $region7: #{tpu_custom_call.1} parent=1 // loop_footer_branch
      %20 = sbr.rel target = $region3
    $region8: #{tpu_custom_call.1} parent=1 // loop_exit
      _
    %1362 = vsyncpa [#allocation3], 1
    %s1363 = scalar_lea.sflag [#allocation3], 1
    %1364 = vsyncpa %s1363, 1
    %1365 = vsyncpa [#allocation6], 1
    %1366 = vsyncpa [#allocation9], 1
    %1367 = vsyncpa [#allocation4], 1
    %s1368 = scalar_lea.sflag [#allocation4], 1
    %1369 = vsyncpa %s1368, 1

</llo_original>
